<compile_context>
chip_gen: v5e
topology: v5e:2x2
jax: 0.10.0
libtpu: 0.0.40
codegen_flags: <defaults>
</compile_context>

<pallas_src>
import jax
import jax.numpy as jnp
from jax.experimental import pallas as pl
from jax.experimental.pallas import tpu as pltpu

KH, KW = 3, 3
CIN, COUT = 3, 64


def _roundup(x, m):
    return (x + m - 1) // m * m


def _conv_kernel(x_ref, w_ref, b_ref, o_ref):
    """One fused MXU matmul per grid step (batch folded into M, KH into K)."""
    # x_ref: (b_tile*h_pad, KH*W*CIN) bf16   w_ref: (KH*W*CIN, w_out*COUT) bf16
    # b_ref: (1, w_out*COUT) f32             o_ref: (b_tile*h_pad, w_out*COUT) f32
    acc = jnp.dot(x_ref[...], w_ref[...], preferred_element_type=jnp.float32)
    o_ref[...] = (acc + b_ref[...]).astype(o_ref.dtype)   # lane+sublane-dense store


def _banded_weight(weight, w, w_out):
    """PyTorch OIHW (COUT,CIN,KH,KW) -> (KH*W*CIN, w_out*COUT) block-Toeplitz matrix.

    Row index k = kh*(W*CIN) + w_idx*CIN + c matches the row-patch lane layout
    built in feng_forward; column index = j*COUT + o.  Entry = weight[o,c,kh,kw]
    with kw = w_idx - j when 0 <= kw < KW, else 0.
    """
    w_hwio = jnp.transpose(weight, (2, 3, 1, 0))               # (KH, KW, CIN, COUT)
    wk = w_hwio.reshape(KH, KW * CIN, COUT)                    # (KH, 9, COUT)
    lane_in = w * CIN
    r = jnp.arange(lane_in)[None, :]                           # (1, lane_in)
    j = jnp.arange(w_out)[:, None]                             # (w_out, 1)
    m = r - j * CIN                                            # (w_out, lane_in)
    valid = (m >= 0) & (m < KW * CIN)
    m_c = jnp.clip(m, 0, KW * CIN - 1)
    banded = jnp.where(valid[None, :, :, None], wk[:, m_c, :], 0.0)  # (KH, w_out, lane_in, COUT)
    banded = jnp.transpose(banded, (0, 2, 1, 3))               # (KH, lane_in, w_out, COUT)
    return banded.reshape(KH * lane_in, w_out * COUT)


def _pick_b_tile(n, h_pad):
    """Images fused into the matmul M per grid step.  Target M = b_tile*h_pad in
    ~[64, 256]; prefer >= 4 grid steps when batch allows (2 per v7x TC), then
    >= 2 (one per TC), then a single step."""
    b_cap = max(1, 256 // h_pad)
    for min_steps, m_floor in ((4, 64), (2, 8), (1, 1)):
        cands = [d for d in range(1, n + 1)
                 if n % d == 0 and d <= b_cap
                 and n // d >= min_steps and d * h_pad >= m_floor]
        if cands:
            return max(cands)
    return 1


def _vmem_limit_bytes(b_tile, h_pad, k_dim, lane_out):
    """Explicit scoped-VMEM budget from the (padded) block shapes, with headroom."""
    x_blk = b_tile * h_pad * _roundup(k_dim, 128) * 2                 # bf16
    w_blk = _roundup(k_dim, 16) * _roundup(lane_out, 128) * 2         # bf16
    b_blk = 8 * _roundup(lane_out, 128) * 4                           # f32 (padded sublanes)
    o_blk = b_tile * h_pad * _roundup(lane_out, 128) * 4              # f32
    need = 2 * (x_blk + w_blk + b_blk + o_blk)     # worst case: all double-buffered
    return int(min(64 << 20, max(2 * need, 16 << 20)))


def prepare_feng_params(weight, bias, w):
    """Weight/bias preprocessing (hoist this out when the parameters are static)."""
    w_out = w - KW + 1
    w_band = _banded_weight(weight.astype(jnp.float32), w, w_out).astype(jnp.bfloat16)
    bias_t = jnp.tile(bias.astype(jnp.float32), w_out).reshape(1, w_out * COUT)
    return w_band, bias_t


def feng_forward(x_nchw, weight, bias, *, b_tile=None):
    """Feng.forward: Conv2d(3, 64, kernel_size=3), stride 1, no padding.

    x_nchw: (N, 3, H, W) f32; weight: (64, 3, 3, 3) OIHW; bias: (64,).
    Returns (N, 64, H-2, W-2) f32.
    """
    n, cin, h, w = x_nchw.shape
    assert cin == CIN and h >= KH and w >= KW
    h_out, w_out = h - KH + 1, w - KW + 1
    lane_in = w * CIN
    k_dim = KH * lane_in
    lane_out = w_out * COUT
    h_pad = _roundup(h_out, 8)                      # sublane-dense M axis

    if b_tile is None:
        b_tile = _pick_b_tile(n, h_pad)
    assert n % b_tile == 0
    m_tile = b_tile * h_pad

    # ---- wrapper-side layout plumbing (pure JAX, lane-dense) ------------------
    # NHWC with W,C folded into the lane axis -> per-row vectors of length W*CIN.
    x_rows = jnp.transpose(x_nchw, (0, 2, 3, 1)).reshape(n, h, lane_in)
    # Row-patch: KH row-shifted views concatenated along lanes (K = KH*W*CIN).
    x_patch = jnp.concatenate(
        [x_rows[:, kh:kh + h_out, :] for kh in range(KH)], axis=-1)
    if h_pad != h_out:                              # zero-pad rows -> sublane-dense M
        x_patch = jnp.pad(x_patch, ((0, 0), (0, h_pad - h_out), (0, 0)))
    x_patch = x_patch.reshape(n * h_pad, k_dim).astype(jnp.bfloat16)

    w_band, bias_t = prepare_feng_params(weight, bias, w)   # bf16 weight, f32 bias
    out_dtype = x_nchw.dtype

    params = pltpu.CompilerParams(
        dimension_semantics=("parallel",),
        vmem_limit_bytes=_vmem_limit_bytes(b_tile, h_pad, k_dim, lane_out))

    def call(single_buffer_consts):
        if single_buffer_consts:
            # Grid-invariant operands: fetched once, keep a single VMEM buffer.
            w_spec = pl.BlockSpec((k_dim, lane_out), lambda b: (0, 0),
                                  pipeline_mode=pl.Buffered(1))
            b_spec = pl.BlockSpec((1, lane_out), lambda b: (0, 0),
                                  pipeline_mode=pl.Buffered(1))
        else:
            w_spec = pl.BlockSpec((k_dim, lane_out), lambda b: (0, 0))
            b_spec = pl.BlockSpec((1, lane_out), lambda b: (0, 0))
        return pl.pallas_call(
            _conv_kernel,
            out_shape=jax.ShapeDtypeStruct((n * h_pad, lane_out), out_dtype),
            grid_spec=pltpu.PrefetchScalarGridSpec(
                num_scalar_prefetch=0,
                grid=(n // b_tile,),
                in_specs=[
                    pl.BlockSpec((m_tile, k_dim), lambda b: (b, 0)),
                    w_spec,
                    b_spec,
                ],
                out_specs=pl.BlockSpec((m_tile, lane_out), lambda b: (b, 0)),
            ),
            compiler_params=params,
        )(x_patch, w_band, bias_t)

    try:
        out_flat = call(True)
    except Exception:
        # pipeline_mode=pl.Buffered(1) not accepted by this JAX build; default
        # double-buffering is still correct (and harmless at these sizes).
        out_flat = call(False)

    # Back to PyTorch NCHW convention; drop the padded output rows.
    out = out_flat.reshape(n, h_pad, w_out, COUT)[:, :h_out]
    return jnp.transpose(out, (0, 3, 1, 2))


if __name__ == "__main__":
    key = jax.random.PRNGKey(0)
    k_x, k_w, k_b = jax.random.split(key, 3)

    # Small deterministic example: batch=4 -> grid=(2,), M=32, K=144, N=896.
    n, h, w = 4, 16, 16
    x = jax.random.normal(k_x, (n, CIN, h, w), dtype=jnp.float32)

    # PyTorch-like uniform init (bound = 1/sqrt(fan_in)).
    fan_in = CIN * KH * KW
    bound = 1.0 / (fan_in ** 0.5)
    weight = jax.random.uniform(k_w, (COUT, CIN, KH, KW),
                                minval=-bound, maxval=bound, dtype=jnp.float32)
    bias = jax.random.uniform(k_b, (COUT,),
                              minval=-bound, maxval=bound, dtype=jnp.float32)

    out = feng_forward(x, weight, bias)
    jax.block_until_ready(out)

    # Cross-check against XLA's f32 conv.
    ref = jax.lax.conv_general_dilated(
        x, weight, window_strides=(1, 1), padding="VALID",
        dimension_numbers=("NCHW", "OIHW", "NCHW")) + bias.reshape(1, COUT, 1, 1)
    assert out.shape == (n, COUT, h - 2, w - 2)
    max_err = float(jnp.max(jnp.abs(out - ref)))
    # bf16 MXU operands with f32 accumulation -> tolerance loosened vs pure f32.
    assert max_err < 3e-2, max_err
    print("KERNEL_OK")
</pallas_src>

<mosaic_0001>
module attributes {stable_mosaic.version = 11 : i64} {
  func.func @_conv_kernel(%arg0: i32, %arg1: memref<32x144xbf16, #tpu.memory_space<vmem>>, %arg2: memref<144x896xbf16, #tpu.memory_space<vmem>>, %arg3: memref<1x896xf32, #tpu.memory_space<vmem>>, %arg4: memref<32x896xf32, #tpu.memory_space<vmem>>) attributes {dimension_semantics = [#tpu.dimension_semantics<parallel>], iteration_bounds = array<i64: 2>, scalar_prefetch = 0 : i64, scratch_operands = 0 : i64, tpu.core_type = #tpu.core_type<tc>, window_params = [{transform_indices = @transform_0, window_bounds = array<i64: 32, 144>}, {pipeline_mode = #tpu.pipeline_mode<synchronous>, transform_indices = @transform_1, window_bounds = array<i64: 144, 896>}, {pipeline_mode = #tpu.pipeline_mode<synchronous>, transform_indices = @transform_2, window_bounds = array<i64: 1, 896>}, {transform_indices = @transform_3, window_bounds = array<i64: 32, 896>}]} {
    %c0 = arith.constant 0 : index
    %c0_0 = arith.constant 0 : index
    %0 = vector.load %arg1[%c0, %c0_0] : memref<32x144xbf16, #tpu.memory_space<vmem>>, vector<32x144xbf16>
    %c0_1 = arith.constant 0 : index
    %c0_2 = arith.constant 0 : index
    %1 = vector.load %arg2[%c0_1, %c0_2] : memref<144x896xbf16, #tpu.memory_space<vmem>>, vector<144x896xbf16>
    %cst = arith.constant dense<0.000000e+00> : vector<32x896xf32>
    %2 = tpu.matmul %0, %1, %cst {dimension_numbers = #tpu.dot_dimension_numbers<[1], [0], [0], [1], [0, 0, 1, 1], [], []>} : vector<32x144xbf16>, vector<144x896xbf16>, vector<32x896xf32> -> vector<32x896xf32>
    %c0_3 = arith.constant 0 : index
    %c0_4 = arith.constant 0 : index
    %3 = vector.load %arg3[%c0_3, %c0_4] : memref<1x896xf32, #tpu.memory_space<vmem>>, vector<1x896xf32>
    %4 = vector.broadcast %3 : vector<1x896xf32> to vector<32x896xf32>
    %5 = arith.addf %2, %4 : vector<32x896xf32>
    %c0_5 = arith.constant 0 : index
    %c0_6 = arith.constant 0 : index
    %6 = vector.load %arg4[%c0_5, %c0_6] : memref<32x896xf32, #tpu.memory_space<vmem>>, vector<32x896xf32>
    tpu.vector_store %arg4[%c0_5, %c0_6], %5 {strides = array<i32>} : memref<32x896xf32, #tpu.memory_space<vmem>>, vector<32x896xf32>,
    return
  }
  func.func @transform_0(%arg0: i32) -> (i32, i32) {
    %c0_i32 = arith.constant 0 : i32
    %c0_i32_0 = arith.constant 0 : i32
    return %arg0, %c0_i32 : i32, i32
  }
  func.func @transform_1(%arg0: i32) -> (i32, i32) {
    %c0_i32 = arith.constant 0 : i32
    %c0_i32_0 = arith.constant 0 : i32
    %c0_i32_1 = arith.constant 0 : i32
    return %c0_i32, %c0_i32_0 : i32, i32
  }
  func.func @transform_2(%arg0: i32) -> (i32, i32) {
    %c0_i32 = arith.constant 0 : i32
    %c0_i32_0 = arith.constant 0 : i32
    %c0_i32_1 = arith.constant 0 : i32
    return %c0_i32, %c0_i32_0 : i32, i32
  }
  func.func @transform_3(%arg0: i32) -> (i32, i32) {
    %c0_i32 = arith.constant 0 : i32
    %c0_i32_0 = arith.constant 0 : i32
    return %arg0, %c0_i32 : i32, i32
  }
}

module attributes {stable_mosaic.version = 11 : i64} {
  func.func @_conv_kernel(%arg0: i32, %arg1: memref<32x144xbf16, #tpu.memory_space<vmem>>, %arg2: memref<144x896xbf16, #tpu.memory_space<vmem>>, %arg3: memref<1x896xf32, #tpu.memory_space<vmem>>, %arg4: memref<32x896xf32, #tpu.memory_space<vmem>>) attributes {dimension_semantics = [#tpu.dimension_semantics<parallel>], iteration_bounds = array<i64: 2>, scalar_prefetch = 0 : i64, scratch_operands = 0 : i64, tpu.core_type = #tpu.core_type<tc>, window_params = [{transform_indices = @transform_0, window_bounds = array<i64: 32, 144>}, {pipeline_mode = #tpu.pipeline_mode<synchronous>, transform_indices = @transform_1, window_bounds = array<i64: 144, 896>}, {pipeline_mode = #tpu.pipeline_mode<synchronous>, transform_indices = @transform_2, window_bounds = array<i64: 1, 896>}, {transform_indices = @transform_3, window_bounds = array<i64: 32, 896>}]} {
    %c0 = arith.constant 0 : index
    %c0_0 = arith.constant 0 : index
    %0 = vector.load %arg1[%c0, %c0_0] : memref<32x144xbf16, #tpu.memory_space<vmem>>, vector<32x144xbf16>
    %c0_1 = arith.constant 0 : index
    %c0_2 = arith.constant 0 : index
    %1 = vector.load %arg2[%c0_1, %c0_2] : memref<144x896xbf16, #tpu.memory_space<vmem>>, vector<144x896xbf16>
    %cst = arith.constant dense<0.000000e+00> : vector<32x896xf32>
    %2 = tpu.matmul %0, %1, %cst {dimension_numbers = #tpu.dot_dimension_numbers<[1], [0], [0], [1], [0, 0, 1, 1], [], []>} : vector<32x144xbf16>, vector<144x896xbf16>, vector<32x896xf32> -> vector<32x896xf32>
    %c0_3 = arith.constant 0 : index
    %c0_4 = arith.constant 0 : index
    %3 = vector.load %arg3[%c0_3, %c0_4] : memref<1x896xf32, #tpu.memory_space<vmem>>, vector<1x896xf32>
    %4 = vector.broadcast %3 : vector<1x896xf32> to vector<32x896xf32>
    %5 = arith.addf %2, %4 : vector<32x896xf32>
    %c0_5 = arith.constant 0 : index
    %c0_6 = arith.constant 0 : index
    %6 = vector.load %arg4[%c0_5, %c0_6] : memref<32x896xf32, #tpu.memory_space<vmem>>, vector<32x896xf32>
    tpu.vector_store %arg4[%c0_5, %c0_6], %5 {strides = array<i32>} : memref<32x896xf32, #tpu.memory_space<vmem>>, vector<32x896xf32>,
    return
  }
  func.func @transform_0(%arg0: i32) -> (i32, i32) {
    %c0_i32 = arith.constant 0 : i32
    %c0_i32_0 = arith.constant 0 : i32
    return %arg0, %c0_i32 : i32, i32
  }
  func.func @transform_1(%arg0: i32) -> (i32, i32) {
    %c0_i32 = arith.constant 0 : i32
    %c0_i32_0 = arith.constant 0 : i32
    %c0_i32_1 = arith.constant 0 : i32
    return %c0_i32, %c0_i32_0 : i32, i32
  }
  func.func @transform_2(%arg0: i32) -> (i32, i32) {
    %c0_i32 = arith.constant 0 : i32
    %c0_i32_0 = arith.constant 0 : i32
    %c0_i32_1 = arith.constant 0 : i32
    return %c0_i32, %c0_i32_0 : i32, i32
  }
  func.func @transform_3(%arg0: i32) -> (i32, i32) {
    %c0_i32 = arith.constant 0 : i32
    %c0_i32_0 = arith.constant 0 : i32
    return %arg0, %c0_i32 : i32, i32
  }
}

</mosaic_0001>

<llo_original>
// kernel: tpu_custom_call.1
$region0: #{tpu_custom_call.1}
  #allocation0 [shape = 'u32[]', space=smem, size = 0x4, offset = 0x4, fixed_abs, tag = 'smem constant byte address 0x4 - core index']
  #allocation1 [shape = 'u32[72,128]{1,0:T(1,128)}', space=vmem, size = 0x9000, scoped, tag = 'internal scratch']
  %s0 = inlined_call_operand.hbm [shape: bf16[64,144], index: 0, kind: input, shape index: {}]
  %s1 = inlined_call_operand.hbm [shape: bf16[144,896], index: 1, kind: input, shape index: {}]
  %s2 = inlined_call_operand.hbm [shape: f32[1,896], index: 2, kind: input, shape index: {}]
  %s3 = inlined_call_operand.hbm [shape: f32[64,896], index: 3, kind: output, shape index: {}]
  %s4 = sld [smem:[#allocation0]]
  $region57: #{tpu_custom_call.1} parent=0
    _
  %s6 = ssub.s32 1, %s4
  %s7 = scalar_select 0, %s6, %s4
  $region1: #{tpu_custom_call.1} parent=0
    #allocation2 [shape = 'u8[32768]{0}', space=vmem, size = 0x8000, scoped, tag = 'input window, operand 0']
    #allocation3 [shape = 's32[2]{0}', space=sflag, size = 0x8, scoped, tag = 'scoped memory for tpu_custom_call.1']
    #allocation4 [shape = 's32[2]{0}', space=sflag, size = 0x8, scoped, tag = 'scoped memory for tpu_custom_call.1']
    #allocation5 [shape = 'u8[258048]{0}', space=vmem, size = 0x3f000, scoped, tag = 'input window, operand 1, single buffered']
    #allocation6 [shape = 's32[1]{0}', space=sflag, size = 0x4, scoped, tag = 'scoped memory for tpu_custom_call.1']
    #allocation7 [shape = 'u8[3584]{0}', space=vmem, size = 0x1000, scoped, tag = 'input window, operand 2, single buffered']
    #allocation8 [shape = 'u8[229376]{0}', space=vmem, size = 0x38000, scoped, tag = 'output window, operand 0']
    %8 = vsyncpa [#allocation3], 0
    %s9 = scalar_lea.sflag [#allocation3], 1
    %10 = vsyncpa %s9, 0
    %11 = vsyncpa [#allocation6], 0
    %12 = vsyncpa [#allocation4], 0
    %s13 = scalar_lea.sflag [#allocation4], 1
    %14 = vsyncpa %s13, 0
    loop: start=0, step=1, limit=4
    $region2: #{tpu_custom_call.1} parent=1 // loop_pre_header
      _
    $region3: #{tpu_custom_call.1} parent=1 // loop_header
      %s16 = sphi 0, %s20
      %p17 = scmp.ge.s32.totalorder %s16, 4
      %s26 = sphi 0, %s28
      %s29 = sphi 0, %s26
      %s30 = sphi 0, %s29
      %s46 = sphi 0, %s30
      %s50 = sphi 0, %s50
      %s52 = sphi 0, %s50
      %s53 = sphi 0, %s52
      %s67 = sphi 0, %s53
      %s71 = sphi 0, %s71
      %s73 = sphi 0, %s71
      %s74 = sphi 0, %s73
      %s88 = sphi 0, %s74
      %s94 = sphi 0, %s96
      %s97 = sphi 0, %s94
      %s98 = sphi 0, %s97
      %s114 = sphi 0, %s98
    $region4: #{tpu_custom_call.1} parent=1 // loop_header_branch
      %19 = sbr.rel (%p17) target = $region8
    $region5: #{tpu_custom_call.1} parent=1 // loop_body
      %s21 = ssub.s32 %s16, 1
      %s22 = ssub.s32 %s16, 2
      %s23 = sadd.s32 %s16, 1
      %s24 = ssub.s32 %s16, %s23
      %p25 = scmp.eq.s32.totalorder %s24, 0
      %s27 = sadd.s32 %s26, 1
      %s28 = scalar_select %p25, %s26, %s27
      %p31 = pneg %p25
      %p32 = scmp.eq.s32.totalorder %s16, 1
      %p33 = por %p31, %p32
      %p34 = scmp.ne.s32.totalorder %s26, %s29
      %p35 = scmp.eq.s32.totalorder %s16, 0
      %p36 = por %p34, %p35
      %p37 = scmp.ne.s32.totalorder %s26, %s29
      %p38 = scmp.eq.s32.totalorder %s21, 1
      %p39 = por %p37, %p38
      %p40 = scmp.ne.s32.totalorder %s29, %s30
      %p41 = scmp.eq.s32.totalorder %s21, 0
      %p42 = por %p40, %p41
      %p43 = scmp.ne.s32.totalorder %s29, %s30
      %p44 = scmp.eq.s32.totalorder %s22, 1
      %p45 = por %p43, %p44
      %p47 = scmp.ne.s32.totalorder %s30, %s46
      %p48 = scmp.eq.s32.totalorder %s22, 0
      %p49 = por %p47, %p48
      %s51 = sadd.s32 %s50, 1
      %p54 = scmp.eq.s32.totalorder %s16, 1
      %p55 = scmp.ne.s32.totalorder %s50, %s52
      %p56 = scmp.eq.s32.totalorder %s16, 0
      %p57 = por %p55, %p56
      %p58 = scmp.ne.s32.totalorder %s50, %s52
      %p59 = scmp.eq.s32.totalorder %s21, 1
      %p60 = por %p58, %p59
      %p61 = scmp.ne.s32.totalorder %s52, %s53
      %p62 = scmp.eq.s32.totalorder %s21, 0
      %p63 = por %p61, %p62
      %p64 = scmp.ne.s32.totalorder %s52, %s53
      %p65 = scmp.eq.s32.totalorder %s22, 1
      %p66 = por %p64, %p65
      %p68 = scmp.ne.s32.totalorder %s53, %s67
      %p69 = scmp.eq.s32.totalorder %s22, 0
      %p70 = por %p68, %p69
      %s72 = sadd.s32 %s71, 1
      %p75 = scmp.eq.s32.totalorder %s16, 1
      %p76 = scmp.ne.s32.totalorder %s71, %s73
      %p77 = scmp.eq.s32.totalorder %s16, 0
      %p78 = por %p76, %p77
      %p79 = scmp.ne.s32.totalorder %s71, %s73
      %p80 = scmp.eq.s32.totalorder %s21, 1
      %p81 = por %p79, %p80
      %p82 = scmp.ne.s32.totalorder %s73, %s74
      %p83 = scmp.eq.s32.totalorder %s21, 0
      %p84 = por %p82, %p83
      %p85 = scmp.ne.s32.totalorder %s73, %s74
      %p86 = scmp.eq.s32.totalorder %s22, 1
      %p87 = por %p85, %p86
      %p89 = scmp.ne.s32.totalorder %s74, %s88
      %p90 = scmp.eq.s32.totalorder %s22, 0
      %p91 = por %p89, %p90
      %s92 = ssub.s32 %s16, %s23
      %p93 = scmp.eq.s32.totalorder %s92, 0
      %s95 = sadd.s32 %s94, 1
      %s96 = scalar_select %p93, %s94, %s95
      %p99 = pneg %p93
      %p100 = scmp.eq.s32.totalorder %s16, 1
      %p101 = por %p99, %p100
      %p102 = scmp.ne.s32.totalorder %s94, %s97
      %p103 = scmp.eq.s32.totalorder %s16, 0
      %p104 = por %p102, %p103
      %p105 = scmp.ne.s32.totalorder %s94, %s97
      %p106 = scmp.eq.s32.totalorder %s21, 1
      %p107 = por %p105, %p106
      %p108 = scmp.ne.s32.totalorder %s97, %s98
      %p109 = scmp.eq.s32.totalorder %s21, 0
      %p110 = por %p108, %p109
      %p111 = scmp.ne.s32.totalorder %s97, %s98
      %p112 = scmp.eq.s32.totalorder %s22, 1
      %p113 = por %p111, %p112
      %p115 = scmp.ne.s32.totalorder %s98, %s114
      %p116 = scmp.eq.s32.totalorder %s22, 0
      %p117 = por %p115, %p116
      %p118 = scmp.le.s32.totalorder 1, %s16
      %p119 = scmp.lt.s32.totalorder %s16, 3
      %p120 = pnand %p118, %p119
      %p121 = pneg %p120
      // Predicated region
      $region9: #{tpu_custom_call.1} parent=5 // pred_check
        _
      $region10: #{tpu_custom_call.1} parent=5 // pred_check_branch
        %123 = sbr.rel (%p120) target = $region12
      $region11: #{tpu_custom_call.1} parent=5 // pred_region
        %s124 = ssub.s32 %s16, 1
        // Predicated region
        $region13: #{tpu_custom_call.1} parent=11 // pred_check
          %p125 = pneg %p63
        $region14: #{tpu_custom_call.1} parent=11 // pred_check_branch
          %127 = sbr.rel (%p125) target = $region16
        $region15: #{tpu_custom_call.1} parent=11 // pred_region
          %129 = vsyncadd [#allocation6], 0
          %s130 = sshll.u32 %s1, 4
          %s131 = int_to_ptr.hbm [resolvable:$true] %s130
          %s132 = sshll.u32 [#allocation5], 4
          %s133 = int_to_ptr.vmem [resolvable:$true] %s132
          %138 = dma.hbm_to_vmem [thread:$0]  %s131, 8064, %s133, [#allocation6], 448, 448, 28
        $region16: #{tpu_custom_call.1} parent=11 // pred_fallthru
          _
        // Predicated region
        $region17: #{tpu_custom_call.1} parent=11 // pred_check
          %p139 = pneg %p84
        $region18: #{tpu_custom_call.1} parent=11 // pred_check_branch
          %141 = sbr.rel (%p139) target = $region20
        $region19: #{tpu_custom_call.1} parent=11 // pred_region
          %143 = vsyncadd [#allocation6], 0
          %s145 = sshll.u32 %s2, 4
          %s146 = int_to_ptr.hbm [resolvable:$true] %s145
          %s147 = sshll.u32 [#allocation7], 4
          %s148 = int_to_ptr.vmem [resolvable:$true] %s147
          %150 = dma.hbm_to_vmem [thread:$0]  %s146, 112, %s148, [#allocation6]
        $region20: #{tpu_custom_call.1} parent=11 // pred_fallthru
          _
      $region12: #{tpu_custom_call.1} parent=5 // pred_fallthru
        _
      %p151 = scmp.lt.s32.totalorder %s16, 2
      // Predicated region
      $region21: #{tpu_custom_call.1} parent=5 // pred_check
        %p152 = pneg %p151
      $region22: #{tpu_custom_call.1} parent=5 // pred_check_branch
        %154 = sbr.rel (%p152) target = $region24
      $region23: #{tpu_custom_call.1} parent=5 // pred_region
        // Predicated region
        $region25: #{tpu_custom_call.1} parent=23 // pred_check
          %p155 = pneg %p36
        $region26: #{tpu_custom_call.1} parent=23 // pred_check_branch
          %157 = sbr.rel (%p155) target = $region28
        $region27: #{tpu_custom_call.1} parent=23 // pred_region
          %s158 = sand.u32 %s26, 1
          %s159 = scalar_lea.sflag [#allocation3], %s158
          %s160 = sand.u32 %s26, 1
          %s161 = smul.addr %s160, 32
          %s162 = scalar_lea.vmem [#allocation2], %s161
          %s163 = smul.u32 4, %s16
          %165 = vsyncadd %s159, 0
          %s166 = smul.addr %s163, 2
          %s167 = smul.addr %s166, 4
          %s168 = scalar_lea.hbm %s0, %s167
          %s169 = sshll.u32 %s168, 4
          %s170 = int_to_ptr.hbm [resolvable:$true] %s169
          %s171 = sshll.u32 %s162, 4
          %s172 = int_to_ptr.vmem [resolvable:$true] %s171
          %177 = dma.hbm_to_vmem [thread:$0]  %s170, 512, %s172, %s159, 128, 128, 8
        $region28: #{tpu_custom_call.1} parent=23 // pred_fallthru
          _
      $region24: #{tpu_custom_call.1} parent=5 // pred_fallthru
        _
      %p178 = scmp.le.s32.totalorder 1, %s16
      %p179 = scmp.lt.s32.totalorder %s16, 3
      %p180 = pnand %p178, %p179
      %p181 = pneg %p180
      // Predicated region
      $region29: #{tpu_custom_call.1} parent=5 // pred_check
        _
      $region30: #{tpu_custom_call.1} parent=5 // pred_check_branch
        %183 = sbr.rel (%p180) target = $region32
      $region31: #{tpu_custom_call.1} parent=5 // pred_region
        %s184 = ssub.s32 %s16, 1
        %s185 = sand.u32 %s29, 1
        %s186 = scalar_lea.sflag [#allocation3], %s185
        %s187 = sand.u32 %s29, 1
        %s188 = smul.addr %s187, 32
        %s189 = scalar_lea.vmem [#allocation2], %s188
        // Predicated region
        $region33: #{tpu_custom_call.1} parent=31 // pred_check
          %p190 = pneg %p42
        $region34: #{tpu_custom_call.1} parent=31 // pred_check_branch
          %192 = sbr.rel (%p190) target = $region36
        $region35: #{tpu_custom_call.1} parent=31 // pred_region
          %194 = dma.done %s186, 512
        $region36: #{tpu_custom_call.1} parent=31 // pred_fallthru
          _
        // Predicated region
        $region37: #{tpu_custom_call.1} parent=31 // pred_check
          %p195 = pneg %p63
        $region38: #{tpu_custom_call.1} parent=31 // pred_check_branch
          %197 = sbr.rel (%p195) target = $region40
        $region39: #{tpu_custom_call.1} parent=31 // pred_region
          %199 = dma.done [#allocation6], 8064
        $region40: #{tpu_custom_call.1} parent=31 // pred_fallthru
          _
        // Predicated region
        $region41: #{tpu_custom_call.1} parent=31 // pred_check
          %p200 = pneg %p84
        $region42: #{tpu_custom_call.1} parent=31 // pred_check_branch
          %202 = sbr.rel (%p200) target = $region44
        $region43: #{tpu_custom_call.1} parent=31 // pred_region
          %204 = dma.done [#allocation6], 112
        $region44: #{tpu_custom_call.1} parent=31 // pred_fallthru
          _
        %s205 = sand.u32 %s29, 1
        %s206 = scalar_lea.sflag [#allocation3], %s205
        %s207 = sand.u32 %s29, 1
        %s208 = smul.addr %s207, 32
        %s209 = scalar_lea.vmem [#allocation2], %s208
        %p210 = pneg %p42
        %p211 = pneg %p39
        %p212 = pneg %p63
        %p213 = pneg %p60
        %p214 = pneg %p84
        %p215 = pneg %p81
        %p216 = pneg %p110
        %p217 = pneg %p107
        %s218 = sand.u32 %s97, 1
        %s219 = scalar_lea.sflag [#allocation4], %s218
        %s220 = sand.u32 %s97, 1
        %s221 = smul.addr %s220, 224
        %s222 = scalar_lea.vmem [#allocation8], %s221
        %s223 = smul.u32 4, %s21
        %s224 = smul.u32 4, %s21
        %v226 = vld [vmem:[%s189] sm:$0xff]
        %v227 = vld [vmem:[%s189 + $0x8] sm:$0xff]
        %v228 = vld [vmem:[%s189 + $0x10] sm:$0xff]
        %v229 = vld [vmem:[%s189 + $0x18] sm:$0xff]
        %v230 = vld [vmem:[#allocation5] sm:$0xff]
        %v231 = vld [vmem:[#allocation5 + $0x8] sm:$0xff]
        %v232 = vld [vmem:[#allocation5 + $0x10] sm:$0xff]
        %v233 = vld [vmem:[#allocation5 + $0x18] sm:$0xf]
        %v234 = vld [vmem:[#allocation5 + $0x1c] sm:$0xff]
        %v235 = vld [vmem:[#allocation5 + $0x24] sm:$0xff]
        %v236 = vld [vmem:[#allocation5 + $0x2c] sm:$0xff]
        %v237 = vld [vmem:[#allocation5 + $0x34] sm:$0xf]
        %v238 = vld [vmem:[#allocation5 + $0x38] sm:$0xff]
        %v239 = vld [vmem:[#allocation5 + $0x40] sm:$0xff]
        %v240 = vld [vmem:[#allocation5 + $0x48] sm:$0xff]
        %v241 = vld [vmem:[#allocation5 + $0x50] sm:$0xf]
        %v242 = vld [vmem:[#allocation5 + $0x54] sm:$0xff]
        %v243 = vld [vmem:[#allocation5 + $0x5c] sm:$0xff]
        %v244 = vld [vmem:[#allocation5 + $0x64] sm:$0xff]
        %v245 = vld [vmem:[#allocation5 + $0x6c] sm:$0xf]
        %v246 = vld [vmem:[#allocation5 + $0x70] sm:$0xff]
        %v247 = vld [vmem:[#allocation5 + $0x78] sm:$0xff]
        %v248 = vld [vmem:[#allocation5 + $0x80] sm:$0xff]
        %v249 = vld [vmem:[#allocation5 + $0x88] sm:$0xf]
        %v250 = vld [vmem:[#allocation5 + $0x8c] sm:$0xff]
        %v251 = vld [vmem:[#allocation5 + $0x94] sm:$0xff]
        %v252 = vld [vmem:[#allocation5 + $0x9c] sm:$0xff]
        %v253 = vld [vmem:[#allocation5 + $0xa4] sm:$0xf]
        %v254 = vld [vmem:[#allocation5 + $0xa8] sm:$0xff]
        %v255 = vld [vmem:[#allocation5 + $0xb0] sm:$0xff]
        %v256 = vld [vmem:[#allocation5 + $0xb8] sm:$0xff]
        %v257 = vld [vmem:[#allocation5 + $0xc0] sm:$0xf]
        %v258 = vld [vmem:[#allocation5 + $0xc4] sm:$0xff]
        %v259 = vld [vmem:[#allocation5 + $0xcc] sm:$0xff]
        %v260 = vld [vmem:[#allocation5 + $0xd4] sm:$0xff]
        %v261 = vld [vmem:[#allocation5 + $0xdc] sm:$0xf]
        %v262 = vld [vmem:[#allocation5 + $0xe0] sm:$0xff]
        %v263 = vld [vmem:[#allocation5 + $0xe8] sm:$0xff]
        %v264 = vld [vmem:[#allocation5 + $0xf0] sm:$0xff]
        %v265 = vld [vmem:[#allocation5 + $0xf8] sm:$0xf]
        %v266 = vld [vmem:[#allocation5 + $0xfc] sm:$0xff]
        %v267 = vld [vmem:[#allocation5 + $0x104] sm:$0xff]
        %v268 = vld [vmem:[#allocation5 + $0x10c] sm:$0xff]
        %v269 = vld [vmem:[#allocation5 + $0x114] sm:$0xf]
        %v270 = vld [vmem:[#allocation5 + $0x118] sm:$0xff]
        %v271 = vld [vmem:[#allocation5 + $0x120] sm:$0xff]
        %v272 = vld [vmem:[#allocation5 + $0x128] sm:$0xff]
        %v273 = vld [vmem:[#allocation5 + $0x130] sm:$0xf]
        %v274 = vld [vmem:[#allocation5 + $0x134] sm:$0xff]
        %v275 = vld [vmem:[#allocation5 + $0x13c] sm:$0xff]
        %v276 = vld [vmem:[#allocation5 + $0x144] sm:$0xff]
        %v277 = vld [vmem:[#allocation5 + $0x14c] sm:$0xf]
        %v278 = vld [vmem:[#allocation5 + $0x150] sm:$0xff]
        %v279 = vld [vmem:[#allocation5 + $0x158] sm:$0xff]
        %v280 = vld [vmem:[#allocation5 + $0x160] sm:$0xff]
        %v281 = vld [vmem:[#allocation5 + $0x168] sm:$0xf]
        %v282 = vld [vmem:[#allocation5 + $0x16c] sm:$0xff]
        %v283 = vld [vmem:[#allocation5 + $0x174] sm:$0xff]
        %v284 = vld [vmem:[#allocation5 + $0x17c] sm:$0xff]
        %v285 = vld [vmem:[#allocation5 + $0x184] sm:$0xf]
        %v286 = vld [vmem:[#allocation5 + $0x188] sm:$0xff]
        %v287 = vld [vmem:[#allocation5 + $0x190] sm:$0xff]
        %v288 = vld [vmem:[#allocation5 + $0x198] sm:$0xff]
        %v289 = vld [vmem:[#allocation5 + $0x1a0] sm:$0xf]
        %v290 = vld [vmem:[#allocation5 + $0x1a4] sm:$0xff]
        %v291 = vld [vmem:[#allocation5 + $0x1ac] sm:$0xff]
        %v292 = vld [vmem:[#allocation5 + $0x1b4] sm:$0xff]
        %v293 = vld [vmem:[#allocation5 + $0x1bc] sm:$0xf]
        %v294 = vld [vmem:[#allocation5 + $0x1c0] sm:$0xff]
        %v295 = vld [vmem:[#allocation5 + $0x1c8] sm:$0xff]
        %v296 = vld [vmem:[#allocation5 + $0x1d0] sm:$0xff]
        %v297 = vld [vmem:[#allocation5 + $0x1d8] sm:$0xf]
        %v298 = vld [vmem:[#allocation5 + $0x1dc] sm:$0xff]
        %v299 = vld [vmem:[#allocation5 + $0x1e4] sm:$0xff]
        %v300 = vld [vmem:[#allocation5 + $0x1ec] sm:$0xff]
        %v301 = vld [vmem:[#allocation5 + $0x1f4] sm:$0xf]
        %v302 = vld [vmem:[#allocation7] sm:$0xff]
        %v304 = vperm.slane %v302, 0
        %v305 = vperm.slane %v302, 1
        %v306 = vperm.slane %v302, 2
        %v307 = vperm.slane %v302, 3
        %v308 = vperm.slane %v302, 4
        %v309 = vperm.slane %v302, 5
        %v310 = vperm.slane %v302, 6
        %v322 = vunpack.c.l.b16 %v226
        %v323 = vunpack.c.h.b16 %v226
        %v324 = vunpack.c.l.b16 %v227
        %v325 = vunpack.c.h.b16 %v227
        %v326 = vunpack.c.l.b16 %v228
        %v327 = vunpack.c.h.b16 %v228
        %v328 = vunpack.c.l.b16 %v229
        %v329 = vunpack.c.h.b16 %v229
        %v330 = vpack.c.b16 %v324, %v322
        %v331 = vpack.c.b16 %v325, %v323
        %v332 = vpack.c.b16 %v328, %v326
        %v333 = vpack.c.b16 %v329, %v327
        %v408 = vunpack.c.l.b16 %v230
        %v409 = vunpack.c.h.b16 %v230
        %v410 = vunpack.c.l.b16 %v231
        %v411 = vunpack.c.h.b16 %v231
        %v412 = vunpack.c.l.b16 %v232
        %v413 = vunpack.c.h.b16 %v232
        %v414 = vunpack.c.l.b16 %v233
        %v415 = vunpack.c.l.b16 %v234
        %v416 = vunpack.c.h.b16 %v234
        %v417 = vunpack.c.l.b16 %v235
        %v418 = vunpack.c.h.b16 %v235
        %v419 = vunpack.c.l.b16 %v236
        %v420 = vunpack.c.h.b16 %v236
        %v421 = vunpack.c.l.b16 %v237
        %v422 = vunpack.c.l.b16 %v238
        %v423 = vunpack.c.h.b16 %v238
        %v424 = vunpack.c.l.b16 %v239
        %v425 = vunpack.c.h.b16 %v239
        %v426 = vunpack.c.l.b16 %v240
        %v427 = vunpack.c.h.b16 %v240
        %v428 = vunpack.c.l.b16 %v241
        %v429 = vunpack.c.l.b16 %v242
        %v430 = vunpack.c.h.b16 %v242
        %v431 = vunpack.c.l.b16 %v243
        %v432 = vunpack.c.h.b16 %v243
        %v433 = vunpack.c.l.b16 %v244
        %v434 = vunpack.c.h.b16 %v244
        %v435 = vunpack.c.l.b16 %v245
        %v436 = vunpack.c.l.b16 %v246
        %v437 = vunpack.c.h.b16 %v246
        %v438 = vunpack.c.l.b16 %v247
        %v439 = vunpack.c.h.b16 %v247
        %v440 = vunpack.c.l.b16 %v248
        %v441 = vunpack.c.h.b16 %v248
        %v442 = vunpack.c.l.b16 %v249
        %v443 = vunpack.c.l.b16 %v250
        %v444 = vunpack.c.h.b16 %v250
        %v445 = vunpack.c.l.b16 %v251
        %v446 = vunpack.c.h.b16 %v251
        %v447 = vunpack.c.l.b16 %v252
        %v448 = vunpack.c.h.b16 %v252
        %v449 = vunpack.c.l.b16 %v253
        %v450 = vunpack.c.l.b16 %v254
        %v451 = vunpack.c.h.b16 %v254
        %v452 = vunpack.c.l.b16 %v255
        %v453 = vunpack.c.h.b16 %v255
        %v454 = vunpack.c.l.b16 %v256
        %v455 = vunpack.c.h.b16 %v256
        %v456 = vunpack.c.l.b16 %v257
        %v457 = vunpack.c.l.b16 %v258
        %v458 = vunpack.c.h.b16 %v258
        %v459 = vunpack.c.l.b16 %v259
        %v460 = vunpack.c.h.b16 %v259
        %v461 = vunpack.c.l.b16 %v260
        %v462 = vunpack.c.h.b16 %v260
        %v463 = vunpack.c.l.b16 %v261
        %v464 = vunpack.c.l.b16 %v262
        %v465 = vunpack.c.h.b16 %v262
        %v466 = vunpack.c.l.b16 %v263
        %v467 = vunpack.c.h.b16 %v263
        %v468 = vunpack.c.l.b16 %v264
        %v469 = vunpack.c.h.b16 %v264
        %v470 = vunpack.c.l.b16 %v265
        %v471 = vunpack.c.l.b16 %v266
        %v472 = vunpack.c.h.b16 %v266
        %v473 = vunpack.c.l.b16 %v267
        %v474 = vunpack.c.h.b16 %v267
        %v475 = vunpack.c.l.b16 %v268
        %v476 = vunpack.c.h.b16 %v268
        %v477 = vunpack.c.l.b16 %v269
        %v478 = vunpack.c.l.b16 %v270
        %v479 = vunpack.c.h.b16 %v270
        %v480 = vunpack.c.l.b16 %v271
        %v481 = vunpack.c.h.b16 %v271
        %v482 = vunpack.c.l.b16 %v272
        %v483 = vunpack.c.h.b16 %v272
        %v484 = vunpack.c.l.b16 %v273
        %v485 = vunpack.c.l.b16 %v274
        %v486 = vunpack.c.h.b16 %v274
        %v487 = vunpack.c.l.b16 %v275
        %v488 = vunpack.c.h.b16 %v275
        %v489 = vunpack.c.l.b16 %v276
        %v490 = vunpack.c.h.b16 %v276
        %v491 = vunpack.c.l.b16 %v277
        %v492 = vunpack.c.l.b16 %v278
        %v493 = vunpack.c.h.b16 %v278
        %v494 = vunpack.c.l.b16 %v279
        %v495 = vunpack.c.h.b16 %v279
        %v496 = vunpack.c.l.b16 %v280
        %v497 = vunpack.c.h.b16 %v280
        %v498 = vunpack.c.l.b16 %v281
        %v499 = vunpack.c.l.b16 %v282
        %v500 = vunpack.c.h.b16 %v282
        %v501 = vunpack.c.l.b16 %v283
        %v502 = vunpack.c.h.b16 %v283
        %v503 = vunpack.c.l.b16 %v284
        %v504 = vunpack.c.h.b16 %v284
        %v505 = vunpack.c.l.b16 %v285
        %v506 = vunpack.c.l.b16 %v286
        %v507 = vunpack.c.h.b16 %v286
        %v508 = vunpack.c.l.b16 %v287
        %v509 = vunpack.c.h.b16 %v287
        %v510 = vunpack.c.l.b16 %v288
        %v511 = vunpack.c.h.b16 %v288
        %v512 = vunpack.c.l.b16 %v289
        %v513 = vunpack.c.l.b16 %v290
        %v514 = vunpack.c.h.b16 %v290
        %v515 = vunpack.c.l.b16 %v291
        %v516 = vunpack.c.h.b16 %v291
        %v517 = vunpack.c.l.b16 %v292
        %v518 = vunpack.c.h.b16 %v292
        %v519 = vunpack.c.l.b16 %v293
        %v520 = vunpack.c.l.b16 %v294
        %v521 = vunpack.c.h.b16 %v294
        %v522 = vunpack.c.l.b16 %v295
        %v523 = vunpack.c.h.b16 %v295
        %v524 = vunpack.c.l.b16 %v296
        %v525 = vunpack.c.h.b16 %v296
        %v526 = vunpack.c.l.b16 %v297
        %v527 = vunpack.c.l.b16 %v298
        %v528 = vunpack.c.h.b16 %v298
        %v529 = vunpack.c.l.b16 %v299
        %v530 = vunpack.c.h.b16 %v299
        %v531 = vunpack.c.l.b16 %v300
        %v532 = vunpack.c.h.b16 %v300
        %v533 = vunpack.c.l.b16 %v301
        %v534 = vpack.c.b16 %v415, %v408
        %v535 = vpack.c.b16 %v416, %v409
        %v536 = vpack.c.b16 %v417, %v410
        %v537 = vpack.c.b16 %v418, %v411
        %v538 = vpack.c.b16 %v419, %v412
        %v539 = vpack.c.b16 %v420, %v413
        %v540 = vpack.c.b16 %v421, %v414
        %v541 = vpack.c.b16 %v429, %v422
        %v542 = vpack.c.b16 %v430, %v423
        %v543 = vpack.c.b16 %v431, %v424
        %v544 = vpack.c.b16 %v432, %v425
        %v545 = vpack.c.b16 %v433, %v426
        %v546 = vpack.c.b16 %v434, %v427
        %v547 = vpack.c.b16 %v435, %v428
        %v548 = vpack.c.b16 %v443, %v436
        %v549 = vpack.c.b16 %v444, %v437
        %v550 = vpack.c.b16 %v445, %v438
        %v551 = vpack.c.b16 %v446, %v439
        %v552 = vpack.c.b16 %v447, %v440
        %v553 = vpack.c.b16 %v448, %v441
        %v554 = vpack.c.b16 %v449, %v442
        %v555 = vpack.c.b16 %v457, %v450
        %v556 = vpack.c.b16 %v458, %v451
        %v557 = vpack.c.b16 %v459, %v452
        %v558 = vpack.c.b16 %v460, %v453
        %v559 = vpack.c.b16 %v461, %v454
        %v560 = vpack.c.b16 %v462, %v455
        %v561 = vpack.c.b16 %v463, %v456
        %v562 = vpack.c.b16 %v471, %v464
        %v563 = vpack.c.b16 %v472, %v465
        %v564 = vpack.c.b16 %v473, %v466
        %v565 = vpack.c.b16 %v474, %v467
        %v566 = vpack.c.b16 %v475, %v468
        %v567 = vpack.c.b16 %v476, %v469
        %v568 = vpack.c.b16 %v477, %v470
        %v569 = vpack.c.b16 %v485, %v478
        %v570 = vpack.c.b16 %v486, %v479
        %v571 = vpack.c.b16 %v487, %v480
        %v572 = vpack.c.b16 %v488, %v481
        %v573 = vpack.c.b16 %v489, %v482
        %v574 = vpack.c.b16 %v490, %v483
        %v575 = vpack.c.b16 %v491, %v484
        %v576 = vpack.c.b16 %v499, %v492
        %v577 = vpack.c.b16 %v500, %v493
        %v578 = vpack.c.b16 %v501, %v494
        %v579 = vpack.c.b16 %v502, %v495
        %v580 = vpack.c.b16 %v503, %v496
        %v581 = vpack.c.b16 %v504, %v497
        %v582 = vpack.c.b16 %v505, %v498
        %v583 = vpack.c.b16 %v513, %v506
        %v584 = vpack.c.b16 %v514, %v507
        %v585 = vpack.c.b16 %v515, %v508
        %v586 = vpack.c.b16 %v516, %v509
        %v587 = vpack.c.b16 %v517, %v510
        %v588 = vpack.c.b16 %v518, %v511
        %v589 = vpack.c.b16 %v519, %v512
        %v590 = vpack.c.b16 %v527, %v520
        %v591 = vpack.c.b16 %v528, %v521
        %v592 = vpack.c.b16 %v529, %v522
        %v593 = vpack.c.b16 %v530, %v523
        %v594 = vpack.c.b16 %v531, %v524
        %v595 = vpack.c.b16 %v532, %v525
        %v596 = vpack.c.b16 %v533, %v526
        %vm660 = vcmask 130048
        %v662 = vsel %vm660, %v331, 0
        %v665 = vsel %vm660, %v333, 0
        %667 = vmatpush.bf16.msra.mxu0 %v583
        %668 = vmatpush.bf16.msra.mxu0 %v576
        %669 = vmatpush.bf16.msra.mxu0 %v569
        %670 = vmatpush.bf16.msra.mxu0 %v562
        %671 = vmatpush.bf16.msra.mxu0 %v555
        %672 = vmatpush.bf16.msra.mxu0 %v548
        %673 = vmatpush.bf16.msra.mxu0 %v541
        %674 = vmatpush.bf16.msra.mxu0 %v534
        %675 = vmatmul.bf16.gmra.mxu0 %v330
        %v676 = vpop.f32.mrf.mxu0
        %v677 = vadd.f32 %v304, %v676
        %v678 = vpop.f32.mrf.mxu0
        %v679 = vadd.f32 %v304, %v678
        %680 = vmatmul.bf16.gmra.mxu0 %v332
        %v681 = vpop.f32.mrf.mxu0
        %v682 = vadd.f32 %v304, %v681
        %v683 = vpop.f32.mrf.mxu0
        %v684 = vadd.f32 %v304, %v683
        %685 = vdwg.mxu0
        %686 = vmatpush.bf16.msra.mxu0 0
        %687 = vmatpush.bf16.msra.mxu0 0
        %688 = vmatpush.bf16.msra.mxu0 0
        %689 = vmatpush.bf16.msra.mxu0 0
        %690 = vmatpush.bf16.msra.mxu0 0
        %691 = vmatpush.bf16.msra.mxu0 0
        %692 = vmatpush.bf16.msra.mxu0 0
        %693 = vmatpush.bf16.msra.mxu0 %v590
        %694 = vmatmul.bf16.gmra.mxu0 %v662
        %v695 = vpop.f32.mrf.mxu0
        %v696 = vadd.f32 %v677, %v695
        %v697 = vpop.f32.mrf.mxu0
        %v698 = vadd.f32 %v679, %v697
        %699 = vmatmul.bf16.gmra.mxu0 %v665
        %v700 = vpop.f32.mrf.mxu0
        %v701 = vadd.f32 %v682, %v700
        %v702 = vpop.f32.mrf.mxu0
        %v703 = vadd.f32 %v684, %v702
        %704 = vdwg.mxu0
        %705 = vmatpush.bf16.msra.mxu0 %v584
        %706 = vmatpush.bf16.msra.mxu0 %v577
        %707 = vmatpush.bf16.msra.mxu0 %v570
        %708 = vmatpush.bf16.msra.mxu0 %v563
        %709 = vmatpush.bf16.msra.mxu0 %v556
        %710 = vmatpush.bf16.msra.mxu0 %v549
        %711 = vmatpush.bf16.msra.mxu0 %v542
        %712 = vmatpush.bf16.msra.mxu0 %v535
        %713 = vmatmul.bf16.gmra.mxu0 %v330
        %v714 = vpop.f32.mrf.mxu0
        %v715 = vadd.f32 %v305, %v714
        %v716 = vpop.f32.mrf.mxu0
        %v717 = vadd.f32 %v305, %v716
        %718 = vmatmul.bf16.gmra.mxu0 %v332
        %v719 = vpop.f32.mrf.mxu0
        %v720 = vadd.f32 %v305, %v719
        %v721 = vpop.f32.mrf.mxu0
        %v722 = vadd.f32 %v305, %v721
        %723 = vdwg.mxu0
        %724 = vmatpush.bf16.msra.mxu0 0
        %725 = vmatpush.bf16.msra.mxu0 0
        %726 = vmatpush.bf16.msra.mxu0 0
        %727 = vmatpush.bf16.msra.mxu0 0
        %728 = vmatpush.bf16.msra.mxu0 0
        %729 = vmatpush.bf16.msra.mxu0 0
        %730 = vmatpush.bf16.msra.mxu0 0
        %731 = vmatpush.bf16.msra.mxu0 %v591
        %732 = vmatmul.bf16.gmra.mxu0 %v662
        %v733 = vpop.f32.mrf.mxu0
        %v734 = vadd.f32 %v715, %v733
        %v735 = vpop.f32.mrf.mxu0
        %v736 = vadd.f32 %v717, %v735
        %737 = vmatmul.bf16.gmra.mxu0 %v665
        %v738 = vpop.f32.mrf.mxu0
        %v739 = vadd.f32 %v720, %v738
        %v740 = vpop.f32.mrf.mxu0
        %v741 = vadd.f32 %v722, %v740
        %742 = vdwg.mxu0
        %743 = vmatpush.bf16.msra.mxu0 %v585
        %744 = vmatpush.bf16.msra.mxu0 %v578
        %745 = vmatpush.bf16.msra.mxu0 %v571
        %746 = vmatpush.bf16.msra.mxu0 %v564
        %747 = vmatpush.bf16.msra.mxu0 %v557
        %748 = vmatpush.bf16.msra.mxu0 %v550
        %749 = vmatpush.bf16.msra.mxu0 %v543
        %750 = vmatpush.bf16.msra.mxu0 %v536
        %751 = vmatmul.bf16.gmra.mxu0 %v330
        %v752 = vpop.f32.mrf.mxu0
        %v753 = vadd.f32 %v306, %v752
        %v754 = vpop.f32.mrf.mxu0
        %v755 = vadd.f32 %v306, %v754
        %756 = vmatmul.bf16.gmra.mxu0 %v332
        %v757 = vpop.f32.mrf.mxu0
        %v758 = vadd.f32 %v306, %v757
        %v759 = vpop.f32.mrf.mxu0
        %v760 = vadd.f32 %v306, %v759
        %761 = vdwg.mxu0
        %762 = vmatpush.bf16.msra.mxu0 0
        %763 = vmatpush.bf16.msra.mxu0 0
        %764 = vmatpush.bf16.msra.mxu0 0
        %765 = vmatpush.bf16.msra.mxu0 0
        %766 = vmatpush.bf16.msra.mxu0 0
        %767 = vmatpush.bf16.msra.mxu0 0
        %768 = vmatpush.bf16.msra.mxu0 0
        %769 = vmatpush.bf16.msra.mxu0 %v592
        %770 = vmatmul.bf16.gmra.mxu0 %v662
        %v771 = vpop.f32.mrf.mxu0
        %v772 = vadd.f32 %v753, %v771
        %v773 = vpop.f32.mrf.mxu0
        %v774 = vadd.f32 %v755, %v773
        %775 = vmatmul.bf16.gmra.mxu0 %v665
        %v776 = vpop.f32.mrf.mxu0
        %v777 = vadd.f32 %v758, %v776
        %v778 = vpop.f32.mrf.mxu0
        %v779 = vadd.f32 %v760, %v778
        %780 = vdwg.mxu0
        %781 = vmatpush.bf16.msra.mxu0 %v586
        %782 = vmatpush.bf16.msra.mxu0 %v579
        %783 = vmatpush.bf16.msra.mxu0 %v572
        %784 = vmatpush.bf16.msra.mxu0 %v565
        %785 = vmatpush.bf16.msra.mxu0 %v558
        %786 = vmatpush.bf16.msra.mxu0 %v551
        %787 = vmatpush.bf16.msra.mxu0 %v544
        %788 = vmatpush.bf16.msra.mxu0 %v537
        %789 = vmatmul.bf16.gmra.mxu0 %v330
        %v790 = vpop.f32.mrf.mxu0
        %v791 = vadd.f32 %v307, %v790
        %v792 = vpop.f32.mrf.mxu0
        %v793 = vadd.f32 %v307, %v792
        %794 = vmatmul.bf16.gmra.mxu0 %v332
        %v795 = vpop.f32.mrf.mxu0
        %v796 = vadd.f32 %v307, %v795
        %v797 = vpop.f32.mrf.mxu0
        %v798 = vadd.f32 %v307, %v797
        %799 = vdwg.mxu0
        %800 = vmatpush.bf16.msra.mxu0 0
        %801 = vmatpush.bf16.msra.mxu0 0
        %802 = vmatpush.bf16.msra.mxu0 0
        %803 = vmatpush.bf16.msra.mxu0 0
        %804 = vmatpush.bf16.msra.mxu0 0
        %805 = vmatpush.bf16.msra.mxu0 0
        %806 = vmatpush.bf16.msra.mxu0 0
        %807 = vmatpush.bf16.msra.mxu0 %v593
        %808 = vmatmul.bf16.gmra.mxu0 %v662
        %v809 = vpop.f32.mrf.mxu0
        %v810 = vadd.f32 %v791, %v809
        %v811 = vpop.f32.mrf.mxu0
        %v812 = vadd.f32 %v793, %v811
        %813 = vmatmul.bf16.gmra.mxu0 %v665
        %v814 = vpop.f32.mrf.mxu0
        %v815 = vadd.f32 %v796, %v814
        %v816 = vpop.f32.mrf.mxu0
        %v817 = vadd.f32 %v798, %v816
        %818 = vdwg.mxu0
        %819 = vmatpush.bf16.msra.mxu0 %v587
        %820 = vmatpush.bf16.msra.mxu0 %v580
        %821 = vmatpush.bf16.msra.mxu0 %v573
        %822 = vmatpush.bf16.msra.mxu0 %v566
        %823 = vmatpush.bf16.msra.mxu0 %v559
        %824 = vmatpush.bf16.msra.mxu0 %v552
        %825 = vmatpush.bf16.msra.mxu0 %v545
        %826 = vmatpush.bf16.msra.mxu0 %v538
        %827 = vmatmul.bf16.gmra.mxu0 %v330
        %v828 = vpop.f32.mrf.mxu0
        %v829 = vadd.f32 %v308, %v828
        %v830 = vpop.f32.mrf.mxu0
        %v831 = vadd.f32 %v308, %v830
        %832 = vmatmul.bf16.gmra.mxu0 %v332
        %v833 = vpop.f32.mrf.mxu0
        %v834 = vadd.f32 %v308, %v833
        %v835 = vpop.f32.mrf.mxu0
        %v836 = vadd.f32 %v308, %v835
        %837 = vdwg.mxu0
        %838 = vmatpush.bf16.msra.mxu0 0
        %839 = vmatpush.bf16.msra.mxu0 0
        %840 = vmatpush.bf16.msra.mxu0 0
        %841 = vmatpush.bf16.msra.mxu0 0
        %842 = vmatpush.bf16.msra.mxu0 0
        %843 = vmatpush.bf16.msra.mxu0 0
        %844 = vmatpush.bf16.msra.mxu0 0
        %845 = vmatpush.bf16.msra.mxu0 %v594
        %846 = vmatmul.bf16.gmra.mxu0 %v662
        %v847 = vpop.f32.mrf.mxu0
        %v848 = vadd.f32 %v829, %v847
        %v849 = vpop.f32.mrf.mxu0
        %v850 = vadd.f32 %v831, %v849
        %851 = vmatmul.bf16.gmra.mxu0 %v665
        %v852 = vpop.f32.mrf.mxu0
        %v853 = vadd.f32 %v834, %v852
        %v854 = vpop.f32.mrf.mxu0
        %v855 = vadd.f32 %v836, %v854
        %856 = vdwg.mxu0
        %857 = vmatpush.bf16.msra.mxu0 %v588
        %858 = vmatpush.bf16.msra.mxu0 %v581
        %859 = vmatpush.bf16.msra.mxu0 %v574
        %860 = vmatpush.bf16.msra.mxu0 %v567
        %861 = vmatpush.bf16.msra.mxu0 %v560
        %862 = vmatpush.bf16.msra.mxu0 %v553
        %863 = vmatpush.bf16.msra.mxu0 %v546
        %864 = vmatpush.bf16.msra.mxu0 %v539
        %865 = vmatmul.bf16.gmra.mxu0 %v330
        %v866 = vpop.f32.mrf.mxu0
        %v867 = vadd.f32 %v309, %v866
        %v868 = vpop.f32.mrf.mxu0
        %v869 = vadd.f32 %v309, %v868
        %870 = vmatmul.bf16.gmra.mxu0 %v332
        %v871 = vpop.f32.mrf.mxu0
        %v872 = vadd.f32 %v309, %v871
        %v873 = vpop.f32.mrf.mxu0
        %v874 = vadd.f32 %v309, %v873
        %875 = vdwg.mxu0
        %876 = vmatpush.bf16.msra.mxu0 0
        %877 = vmatpush.bf16.msra.mxu0 0
        %878 = vmatpush.bf16.msra.mxu0 0
        %879 = vmatpush.bf16.msra.mxu0 0
        %880 = vmatpush.bf16.msra.mxu0 0
        %881 = vmatpush.bf16.msra.mxu0 0
        %882 = vmatpush.bf16.msra.mxu0 0
        %883 = vmatpush.bf16.msra.mxu0 %v595
        %884 = vmatmul.bf16.gmra.mxu0 %v662
        %v885 = vpop.f32.mrf.mxu0
        %v886 = vadd.f32 %v867, %v885
        %v887 = vpop.f32.mrf.mxu0
        %v888 = vadd.f32 %v869, %v887
        %889 = vmatmul.bf16.gmra.mxu0 %v665
        %v890 = vpop.f32.mrf.mxu0
        %v891 = vadd.f32 %v872, %v890
        %v892 = vpop.f32.mrf.mxu0
        %v893 = vadd.f32 %v874, %v892
        %894 = vdwg.mxu0
        %895 = vmatpush.bf16.msra.mxu0 %v589
        %896 = vmatpush.bf16.msra.mxu0 %v582
        %897 = vmatpush.bf16.msra.mxu0 %v575
        %898 = vmatpush.bf16.msra.mxu0 %v568
        %899 = vmatpush.bf16.msra.mxu0 %v561
        %900 = vmatpush.bf16.msra.mxu0 %v554
        %901 = vmatpush.bf16.msra.mxu0 %v547
        %902 = vmatpush.bf16.msra.mxu0 %v540
        %903 = vmatmul.bf16.gmra.mxu0 %v330
        %v904 = vpop.f32.mrf.mxu0
        %v905 = vadd.f32 %v310, %v904
        %v906 = vpop.f32.mrf.mxu0
        %v907 = vadd.f32 %v310, %v906
        %908 = vmatmul.bf16.gmra.mxu0 %v332
        %v909 = vpop.f32.mrf.mxu0
        %v910 = vadd.f32 %v310, %v909
        %v911 = vpop.f32.mrf.mxu0
        %v912 = vadd.f32 %v310, %v911
        %913 = vdwg.mxu0
        %914 = vmatpush.bf16.msra.mxu0 0
        %915 = vmatpush.bf16.msra.mxu0 0
        %916 = vmatpush.bf16.msra.mxu0 0
        %917 = vmatpush.bf16.msra.mxu0 0
        %918 = vmatpush.bf16.msra.mxu0 0
        %919 = vmatpush.bf16.msra.mxu0 0
        %920 = vmatpush.bf16.msra.mxu0 0
        %921 = vmatpush.bf16.msra.mxu0 %v596
        %922 = vmatmul.bf16.gmra.mxu0 %v662
        %v923 = vpop.f32.mrf.mxu0
        %v924 = vadd.f32 %v905, %v923
        %v925 = vpop.f32.mrf.mxu0
        %v926 = vadd.f32 %v907, %v925
        %927 = vmatmul.bf16.gmra.mxu0 %v665
        %v928 = vpop.f32.mrf.mxu0
        %v929 = vadd.f32 %v910, %v928
        %v930 = vpop.f32.mrf.mxu0
        %v931 = vadd.f32 %v912, %v930
        %932 = vdwg.mxu0
        %933 = vst [vmem:[%s222] sm:$0xff] %v696
        %934 = vst [vmem:[%s222 + $0x8] sm:$0xff] %v734
        %935 = vst [vmem:[%s222 + $0x10] sm:$0xff] %v772
        %936 = vst [vmem:[%s222 + $0x18] sm:$0xff] %v810
        %937 = vst [vmem:[%s222 + $0x20] sm:$0xff] %v848
        %938 = vst [vmem:[%s222 + $0x28] sm:$0xff] %v886
        %939 = vst [vmem:[%s222 + $0x30] sm:$0xff] %v924
        %940 = vst [vmem:[%s222 + $0x38] sm:$0xff] %v698
        %941 = vst [vmem:[%s222 + $0x40] sm:$0xff] %v736
        %942 = vst [vmem:[%s222 + $0x48] sm:$0xff] %v774
        %943 = vst [vmem:[%s222 + $0x50] sm:$0xff] %v812
        %944 = vst [vmem:[%s222 + $0x58] sm:$0xff] %v850
        %945 = vst [vmem:[%s222 + $0x60] sm:$0xff] %v888
        %946 = vst [vmem:[%s222 + $0x68] sm:$0xff] %v926
        %947 = vst [vmem:[%s222 + $0x70] sm:$0xff] %v701
        %948 = vst [vmem:[%s222 + $0x78] sm:$0xff] %v739
        %949 = vst [vmem:[%s222 + $0x80] sm:$0xff] %v777
        %950 = vst [vmem:[%s222 + $0x88] sm:$0xff] %v815
        %951 = vst [vmem:[%s222 + $0x90] sm:$0xff] %v853
        %952 = vst [vmem:[%s222 + $0x98] sm:$0xff] %v891
        %953 = vst [vmem:[%s222 + $0xa0] sm:$0xff] %v929
        %954 = vst [vmem:[%s222 + $0xa8] sm:$0xff] %v703
        %955 = vst [vmem:[%s222 + $0xb0] sm:$0xff] %v741
        %956 = vst [vmem:[%s222 + $0xb8] sm:$0xff] %v779
        %957 = vst [vmem:[%s222 + $0xc0] sm:$0xff] %v817
        %958 = vst [vmem:[%s222 + $0xc8] sm:$0xff] %v855
        %959 = vst [vmem:[%s222 + $0xd0] sm:$0xff] %v893
        %960 = vst [vmem:[%s222 + $0xd8] sm:$0xff] %v931
        %s961 = sand.u32 %s97, 1
        %s962 = scalar_lea.sflag [#allocation4], %s961
        %s963 = sand.u32 %s97, 1
        %s964 = smul.addr %s963, 224
        %s965 = scalar_lea.vmem [#allocation8], %s964
        // Predicated region
        $region45: #{tpu_custom_call.1} parent=31 // pred_check
          %p966 = pneg %p107
        $region46: #{tpu_custom_call.1} parent=31 // pred_check_branch
          %968 = sbr.rel (%p966) target = $region48
        $region47: #{tpu_custom_call.1} parent=31 // pred_region
          %s969 = smul.u32 4, %s21
          %971 = vsyncadd %s962, 0
          %s972 = smul.addr %s969, 7
          %s973 = smul.addr %s972, 8
          %s974 = scalar_lea.hbm %s3, %s973
          %s975 = sshll.u32 %s965, 4
          %s976 = int_to_ptr.vmem [resolvable:$true] %s975
          %s977 = sshll.u32 %s974, 4
          %s978 = int_to_ptr.hbm [resolvable:$true] %s977
          %983 = dma.vmem_to_hbm [thread:$0]  %s976, 3584, %s978, %s962, 896, 896, 56
        $region48: #{tpu_custom_call.1} parent=31 // pred_fallthru
          _
      $region32: #{tpu_custom_call.1} parent=5 // pred_fallthru
        _
      %p984 = scmp.le.s32.totalorder 2, %s16
      // Predicated region
      $region49: #{tpu_custom_call.1} parent=5 // pred_check
        %p985 = pneg %p984
      $region50: #{tpu_custom_call.1} parent=5 // pred_check_branch
        %987 = sbr.rel (%p985) target = $region52
      $region51: #{tpu_custom_call.1} parent=5 // pred_region
        %s988 = ssub.s32 %s16, 2
        // Predicated region
        $region53: #{tpu_custom_call.1} parent=51 // pred_check
          %p989 = pneg %p113
        $region54: #{tpu_custom_call.1} parent=51 // pred_check_branch
          %991 = sbr.rel (%p989) target = $region56
        $region55: #{tpu_custom_call.1} parent=51 // pred_region
          %s992 = sand.u32 %s98, 1
          %s993 = scalar_lea.sflag [#allocation4], %s992
          %s994 = sand.u32 %s98, 1
          %s995 = smul.addr %s994, 224
          %s996 = scalar_lea.vmem [#allocation8], %s995
          %998 = dma.done %s993, 3584
        $region56: #{tpu_custom_call.1} parent=51 // pred_fallthru
          _
      $region52: #{tpu_custom_call.1} parent=5 // pred_fallthru
        _
    $region6: #{tpu_custom_call.1} parent=1 // loop_footer
      %s20 = sadd.s32 1, %s16
    $region7: #{tpu_custom_call.1} parent=1 // loop_footer_branch
      %15 = sbr.rel target = $region3
    $region8: #{tpu_custom_call.1} parent=1 // loop_exit
      _
    %999 = vsyncpa [#allocation3], 1
    %s1000 = scalar_lea.sflag [#allocation3], 1
    %1001 = vsyncpa %s1000, 1
    %1002 = vsyncpa [#allocation6], 1
    %1003 = vsyncpa [#allocation4], 1
    %s1004 = scalar_lea.sflag [#allocation4], 1
    %1005 = vsyncpa %s1004, 1

// kernel: tpu_custom_call.1
$region0: #{tpu_custom_call.1}
  #allocation0 [shape = 'u32[]', space=smem, size = 0x4, offset = 0x4, fixed_abs, tag = 'smem constant byte address 0x4 - core index']
  #allocation1 [shape = 'u32[72,128]{1,0:T(1,128)}', space=vmem, size = 0x9000, scoped, tag = 'internal scratch']
  %s0 = inlined_call_operand.hbm [shape: bf16[64,144], index: 0, kind: input, shape index: {}]
  %s1 = inlined_call_operand.hbm [shape: bf16[144,896], index: 1, kind: input, shape index: {}]
  %s2 = inlined_call_operand.hbm [shape: f32[1,896], index: 2, kind: input, shape index: {}]
  %s3 = inlined_call_operand.hbm [shape: f32[64,896], index: 3, kind: output, shape index: {}]
  %s4 = sld [smem:[#allocation0]]
  $region57: #{tpu_custom_call.1} parent=0
    _
  %s6 = ssub.s32 1, %s4
  %s7 = scalar_select 0, %s6, %s4
  $region1: #{tpu_custom_call.1} parent=0
    #allocation2 [shape = 'u8[32768]{0}', space=vmem, size = 0x8000, scoped, tag = 'input window, operand 0']
    #allocation3 [shape = 's32[2]{0}', space=sflag, size = 0x8, scoped, tag = 'scoped memory for tpu_custom_call.1']
    #allocation4 [shape = 's32[2]{0}', space=sflag, size = 0x8, scoped, tag = 'scoped memory for tpu_custom_call.1']
    #allocation5 [shape = 'u8[258048]{0}', space=vmem, size = 0x3f000, scoped, tag = 'input window, operand 1, single buffered']
    #allocation6 [shape = 's32[1]{0}', space=sflag, size = 0x4, scoped, tag = 'scoped memory for tpu_custom_call.1']
    #allocation7 [shape = 'u8[3584]{0}', space=vmem, size = 0x1000, scoped, tag = 'input window, operand 2, single buffered']
    #allocation8 [shape = 'u8[229376]{0}', space=vmem, size = 0x38000, scoped, tag = 'output window, operand 0']
    %8 = vsyncpa [#allocation3], 0
    %s9 = scalar_lea.sflag [#allocation3], 1
    %10 = vsyncpa %s9, 0
    %11 = vsyncpa [#allocation6], 0
    %12 = vsyncpa [#allocation4], 0
    %s13 = scalar_lea.sflag [#allocation4], 1
    %14 = vsyncpa %s13, 0
    loop: start=0, step=1, limit=4
    $region2: #{tpu_custom_call.1} parent=1 // loop_pre_header
      _
    $region3: #{tpu_custom_call.1} parent=1 // loop_header
      %s16 = sphi 0, %s20
      %p17 = scmp.ge.s32.totalorder %s16, 4
      %s26 = sphi 0, %s28
      %s29 = sphi 0, %s26
      %s30 = sphi 0, %s29
      %s46 = sphi 0, %s30
      %s50 = sphi 0, %s50
      %s52 = sphi 0, %s50
      %s53 = sphi 0, %s52
      %s67 = sphi 0, %s53
      %s71 = sphi 0, %s71
      %s73 = sphi 0, %s71
      %s74 = sphi 0, %s73
      %s88 = sphi 0, %s74
      %s94 = sphi 0, %s96
      %s97 = sphi 0, %s94
      %s98 = sphi 0, %s97
      %s114 = sphi 0, %s98
    $region4: #{tpu_custom_call.1} parent=1 // loop_header_branch
      %19 = sbr.rel (%p17) target = $region8
    $region5: #{tpu_custom_call.1} parent=1 // loop_body
      %s21 = ssub.s32 %s16, 1
      %s22 = ssub.s32 %s16, 2
      %s23 = sadd.s32 %s16, 1
      %s24 = ssub.s32 %s16, %s23
      %p25 = scmp.eq.s32.totalorder %s24, 0
      %s27 = sadd.s32 %s26, 1
      %s28 = scalar_select %p25, %s26, %s27
      %p31 = pneg %p25
      %p32 = scmp.eq.s32.totalorder %s16, 1
      %p33 = por %p31, %p32
      %p34 = scmp.ne.s32.totalorder %s26, %s29
      %p35 = scmp.eq.s32.totalorder %s16, 0
      %p36 = por %p34, %p35
      %p37 = scmp.ne.s32.totalorder %s26, %s29
      %p38 = scmp.eq.s32.totalorder %s21, 1
      %p39 = por %p37, %p38
      %p40 = scmp.ne.s32.totalorder %s29, %s30
      %p41 = scmp.eq.s32.totalorder %s21, 0
      %p42 = por %p40, %p41
      %p43 = scmp.ne.s32.totalorder %s29, %s30
      %p44 = scmp.eq.s32.totalorder %s22, 1
      %p45 = por %p43, %p44
      %p47 = scmp.ne.s32.totalorder %s30, %s46
      %p48 = scmp.eq.s32.totalorder %s22, 0
      %p49 = por %p47, %p48
      %s51 = sadd.s32 %s50, 1
      %p54 = scmp.eq.s32.totalorder %s16, 1
      %p55 = scmp.ne.s32.totalorder %s50, %s52
      %p56 = scmp.eq.s32.totalorder %s16, 0
      %p57 = por %p55, %p56
      %p58 = scmp.ne.s32.totalorder %s50, %s52
      %p59 = scmp.eq.s32.totalorder %s21, 1
      %p60 = por %p58, %p59
      %p61 = scmp.ne.s32.totalorder %s52, %s53
      %p62 = scmp.eq.s32.totalorder %s21, 0
      %p63 = por %p61, %p62
      %p64 = scmp.ne.s32.totalorder %s52, %s53
      %p65 = scmp.eq.s32.totalorder %s22, 1
      %p66 = por %p64, %p65
      %p68 = scmp.ne.s32.totalorder %s53, %s67
      %p69 = scmp.eq.s32.totalorder %s22, 0
      %p70 = por %p68, %p69
      %s72 = sadd.s32 %s71, 1
      %p75 = scmp.eq.s32.totalorder %s16, 1
      %p76 = scmp.ne.s32.totalorder %s71, %s73
      %p77 = scmp.eq.s32.totalorder %s16, 0
      %p78 = por %p76, %p77
      %p79 = scmp.ne.s32.totalorder %s71, %s73
      %p80 = scmp.eq.s32.totalorder %s21, 1
      %p81 = por %p79, %p80
      %p82 = scmp.ne.s32.totalorder %s73, %s74
      %p83 = scmp.eq.s32.totalorder %s21, 0
      %p84 = por %p82, %p83
      %p85 = scmp.ne.s32.totalorder %s73, %s74
      %p86 = scmp.eq.s32.totalorder %s22, 1
      %p87 = por %p85, %p86
      %p89 = scmp.ne.s32.totalorder %s74, %s88
      %p90 = scmp.eq.s32.totalorder %s22, 0
      %p91 = por %p89, %p90
      %s92 = ssub.s32 %s16, %s23
      %p93 = scmp.eq.s32.totalorder %s92, 0
      %s95 = sadd.s32 %s94, 1
      %s96 = scalar_select %p93, %s94, %s95
      %p99 = pneg %p93
      %p100 = scmp.eq.s32.totalorder %s16, 1
      %p101 = por %p99, %p100
      %p102 = scmp.ne.s32.totalorder %s94, %s97
      %p103 = scmp.eq.s32.totalorder %s16, 0
      %p104 = por %p102, %p103
      %p105 = scmp.ne.s32.totalorder %s94, %s97
      %p106 = scmp.eq.s32.totalorder %s21, 1
      %p107 = por %p105, %p106
      %p108 = scmp.ne.s32.totalorder %s97, %s98
      %p109 = scmp.eq.s32.totalorder %s21, 0
      %p110 = por %p108, %p109
      %p111 = scmp.ne.s32.totalorder %s97, %s98
      %p112 = scmp.eq.s32.totalorder %s22, 1
      %p113 = por %p111, %p112
      %p115 = scmp.ne.s32.totalorder %s98, %s114
      %p116 = scmp.eq.s32.totalorder %s22, 0
      %p117 = por %p115, %p116
      %p118 = scmp.le.s32.totalorder 1, %s16
      %p119 = scmp.lt.s32.totalorder %s16, 3
      %p120 = pnand %p118, %p119
      %p121 = pneg %p120
      // Predicated region
      $region9: #{tpu_custom_call.1} parent=5 // pred_check
        _
      $region10: #{tpu_custom_call.1} parent=5 // pred_check_branch
        %123 = sbr.rel (%p120) target = $region12
      $region11: #{tpu_custom_call.1} parent=5 // pred_region
        %s124 = ssub.s32 %s16, 1
        // Predicated region
        $region13: #{tpu_custom_call.1} parent=11 // pred_check
          %p125 = pneg %p63
        $region14: #{tpu_custom_call.1} parent=11 // pred_check_branch
          %127 = sbr.rel (%p125) target = $region16
        $region15: #{tpu_custom_call.1} parent=11 // pred_region
          %129 = vsyncadd [#allocation6], 0
          %s130 = sshll.u32 %s1, 4
          %s131 = int_to_ptr.hbm [resolvable:$true] %s130
          %s132 = sshll.u32 [#allocation5], 4
          %s133 = int_to_ptr.vmem [resolvable:$true] %s132
          %138 = dma.hbm_to_vmem [thread:$0]  %s131, 8064, %s133, [#allocation6], 448, 448, 28
        $region16: #{tpu_custom_call.1} parent=11 // pred_fallthru
          _
        // Predicated region
        $region17: #{tpu_custom_call.1} parent=11 // pred_check
          %p139 = pneg %p84
        $region18: #{tpu_custom_call.1} parent=11 // pred_check_branch
          %141 = sbr.rel (%p139) target = $region20
        $region19: #{tpu_custom_call.1} parent=11 // pred_region
          %143 = vsyncadd [#allocation6], 0
          %s145 = sshll.u32 %s2, 4
          %s146 = int_to_ptr.hbm [resolvable:$true] %s145
          %s147 = sshll.u32 [#allocation7], 4
          %s148 = int_to_ptr.vmem [resolvable:$true] %s147
          %150 = dma.hbm_to_vmem [thread:$0]  %s146, 112, %s148, [#allocation6]
        $region20: #{tpu_custom_call.1} parent=11 // pred_fallthru
          _
      $region12: #{tpu_custom_call.1} parent=5 // pred_fallthru
        _
      %p151 = scmp.lt.s32.totalorder %s16, 2
      // Predicated region
      $region21: #{tpu_custom_call.1} parent=5 // pred_check
        %p152 = pneg %p151
      $region22: #{tpu_custom_call.1} parent=5 // pred_check_branch
        %154 = sbr.rel (%p152) target = $region24
      $region23: #{tpu_custom_call.1} parent=5 // pred_region
        // Predicated region
        $region25: #{tpu_custom_call.1} parent=23 // pred_check
          %p155 = pneg %p36
        $region26: #{tpu_custom_call.1} parent=23 // pred_check_branch
          %157 = sbr.rel (%p155) target = $region28
        $region27: #{tpu_custom_call.1} parent=23 // pred_region
          %s158 = sand.u32 %s26, 1
          %s159 = scalar_lea.sflag [#allocation3], %s158
          %s160 = sand.u32 %s26, 1
          %s161 = smul.addr %s160, 32
          %s162 = scalar_lea.vmem [#allocation2], %s161
          %s163 = smul.u32 4, %s16
          %165 = vsyncadd %s159, 0
          %s166 = smul.addr %s163, 2
          %s167 = smul.addr %s166, 4
          %s168 = scalar_lea.hbm %s0, %s167
          %s169 = sshll.u32 %s168, 4
          %s170 = int_to_ptr.hbm [resolvable:$true] %s169
          %s171 = sshll.u32 %s162, 4
          %s172 = int_to_ptr.vmem [resolvable:$true] %s171
          %177 = dma.hbm_to_vmem [thread:$0]  %s170, 512, %s172, %s159, 128, 128, 8
        $region28: #{tpu_custom_call.1} parent=23 // pred_fallthru
          _
      $region24: #{tpu_custom_call.1} parent=5 // pred_fallthru
        _
      %p178 = scmp.le.s32.totalorder 1, %s16
      %p179 = scmp.lt.s32.totalorder %s16, 3
      %p180 = pnand %p178, %p179
      %p181 = pneg %p180
      // Predicated region
      $region29: #{tpu_custom_call.1} parent=5 // pred_check
        _
      $region30: #{tpu_custom_call.1} parent=5 // pred_check_branch
        %183 = sbr.rel (%p180) target = $region32
      $region31: #{tpu_custom_call.1} parent=5 // pred_region
        %s184 = ssub.s32 %s16, 1
        %s185 = sand.u32 %s29, 1
        %s186 = scalar_lea.sflag [#allocation3], %s185
        %s187 = sand.u32 %s29, 1
        %s188 = smul.addr %s187, 32
        %s189 = scalar_lea.vmem [#allocation2], %s188
        // Predicated region
        $region33: #{tpu_custom_call.1} parent=31 // pred_check
          %p190 = pneg %p42
        $region34: #{tpu_custom_call.1} parent=31 // pred_check_branch
          %192 = sbr.rel (%p190) target = $region36
        $region35: #{tpu_custom_call.1} parent=31 // pred_region
          %194 = dma.done %s186, 512
        $region36: #{tpu_custom_call.1} parent=31 // pred_fallthru
          _
        // Predicated region
        $region37: #{tpu_custom_call.1} parent=31 // pred_check
          %p195 = pneg %p63
        $region38: #{tpu_custom_call.1} parent=31 // pred_check_branch
          %197 = sbr.rel (%p195) target = $region40
        $region39: #{tpu_custom_call.1} parent=31 // pred_region
          %199 = dma.done [#allocation6], 8064
        $region40: #{tpu_custom_call.1} parent=31 // pred_fallthru
          _
        // Predicated region
        $region41: #{tpu_custom_call.1} parent=31 // pred_check
          %p200 = pneg %p84
        $region42: #{tpu_custom_call.1} parent=31 // pred_check_branch
          %202 = sbr.rel (%p200) target = $region44
        $region43: #{tpu_custom_call.1} parent=31 // pred_region
          %204 = dma.done [#allocation6], 112
        $region44: #{tpu_custom_call.1} parent=31 // pred_fallthru
          _
        %s205 = sand.u32 %s29, 1
        %s206 = scalar_lea.sflag [#allocation3], %s205
        %s207 = sand.u32 %s29, 1
        %s208 = smul.addr %s207, 32
        %s209 = scalar_lea.vmem [#allocation2], %s208
        %p210 = pneg %p42
        %p211 = pneg %p39
        %p212 = pneg %p63
        %p213 = pneg %p60
        %p214 = pneg %p84
        %p215 = pneg %p81
        %p216 = pneg %p110
        %p217 = pneg %p107
        %s218 = sand.u32 %s97, 1
        %s219 = scalar_lea.sflag [#allocation4], %s218
        %s220 = sand.u32 %s97, 1
        %s221 = smul.addr %s220, 224
        %s222 = scalar_lea.vmem [#allocation8], %s221
        %s223 = smul.u32 4, %s21
        %s224 = smul.u32 4, %s21
        %v226 = vld [vmem:[%s189] sm:$0xff]
        %v227 = vld [vmem:[%s189 + $0x8] sm:$0xff]
        %v228 = vld [vmem:[%s189 + $0x10] sm:$0xff]
        %v229 = vld [vmem:[%s189 + $0x18] sm:$0xff]
        %v230 = vld [vmem:[#allocation5] sm:$0xff]
        %v231 = vld [vmem:[#allocation5 + $0x8] sm:$0xff]
        %v232 = vld [vmem:[#allocation5 + $0x10] sm:$0xff]
        %v233 = vld [vmem:[#allocation5 + $0x18] sm:$0xf]
        %v234 = vld [vmem:[#allocation5 + $0x1c] sm:$0xff]
        %v235 = vld [vmem:[#allocation5 + $0x24] sm:$0xff]
        %v236 = vld [vmem:[#allocation5 + $0x2c] sm:$0xff]
        %v237 = vld [vmem:[#allocation5 + $0x34] sm:$0xf]
        %v238 = vld [vmem:[#allocation5 + $0x38] sm:$0xff]
        %v239 = vld [vmem:[#allocation5 + $0x40] sm:$0xff]
        %v240 = vld [vmem:[#allocation5 + $0x48] sm:$0xff]
        %v241 = vld [vmem:[#allocation5 + $0x50] sm:$0xf]
        %v242 = vld [vmem:[#allocation5 + $0x54] sm:$0xff]
        %v243 = vld [vmem:[#allocation5 + $0x5c] sm:$0xff]
        %v244 = vld [vmem:[#allocation5 + $0x64] sm:$0xff]
        %v245 = vld [vmem:[#allocation5 + $0x6c] sm:$0xf]
        %v246 = vld [vmem:[#allocation5 + $0x70] sm:$0xff]
        %v247 = vld [vmem:[#allocation5 + $0x78] sm:$0xff]
        %v248 = vld [vmem:[#allocation5 + $0x80] sm:$0xff]
        %v249 = vld [vmem:[#allocation5 + $0x88] sm:$0xf]
        %v250 = vld [vmem:[#allocation5 + $0x8c] sm:$0xff]
        %v251 = vld [vmem:[#allocation5 + $0x94] sm:$0xff]
        %v252 = vld [vmem:[#allocation5 + $0x9c] sm:$0xff]
        %v253 = vld [vmem:[#allocation5 + $0xa4] sm:$0xf]
        %v254 = vld [vmem:[#allocation5 + $0xa8] sm:$0xff]
        %v255 = vld [vmem:[#allocation5 + $0xb0] sm:$0xff]
        %v256 = vld [vmem:[#allocation5 + $0xb8] sm:$0xff]
        %v257 = vld [vmem:[#allocation5 + $0xc0] sm:$0xf]
        %v258 = vld [vmem:[#allocation5 + $0xc4] sm:$0xff]
        %v259 = vld [vmem:[#allocation5 + $0xcc] sm:$0xff]
        %v260 = vld [vmem:[#allocation5 + $0xd4] sm:$0xff]
        %v261 = vld [vmem:[#allocation5 + $0xdc] sm:$0xf]
        %v262 = vld [vmem:[#allocation5 + $0xe0] sm:$0xff]
        %v263 = vld [vmem:[#allocation5 + $0xe8] sm:$0xff]
        %v264 = vld [vmem:[#allocation5 + $0xf0] sm:$0xff]
        %v265 = vld [vmem:[#allocation5 + $0xf8] sm:$0xf]
        %v266 = vld [vmem:[#allocation5 + $0xfc] sm:$0xff]
        %v267 = vld [vmem:[#allocation5 + $0x104] sm:$0xff]
        %v268 = vld [vmem:[#allocation5 + $0x10c] sm:$0xff]
        %v269 = vld [vmem:[#allocation5 + $0x114] sm:$0xf]
        %v270 = vld [vmem:[#allocation5 + $0x118] sm:$0xff]
        %v271 = vld [vmem:[#allocation5 + $0x120] sm:$0xff]
        %v272 = vld [vmem:[#allocation5 + $0x128] sm:$0xff]
        %v273 = vld [vmem:[#allocation5 + $0x130] sm:$0xf]
        %v274 = vld [vmem:[#allocation5 + $0x134] sm:$0xff]
        %v275 = vld [vmem:[#allocation5 + $0x13c] sm:$0xff]
        %v276 = vld [vmem:[#allocation5 + $0x144] sm:$0xff]
        %v277 = vld [vmem:[#allocation5 + $0x14c] sm:$0xf]
        %v278 = vld [vmem:[#allocation5 + $0x150] sm:$0xff]
        %v279 = vld [vmem:[#allocation5 + $0x158] sm:$0xff]
        %v280 = vld [vmem:[#allocation5 + $0x160] sm:$0xff]
        %v281 = vld [vmem:[#allocation5 + $0x168] sm:$0xf]
        %v282 = vld [vmem:[#allocation5 + $0x16c] sm:$0xff]
        %v283 = vld [vmem:[#allocation5 + $0x174] sm:$0xff]
        %v284 = vld [vmem:[#allocation5 + $0x17c] sm:$0xff]
        %v285 = vld [vmem:[#allocation5 + $0x184] sm:$0xf]
        %v286 = vld [vmem:[#allocation5 + $0x188] sm:$0xff]
        %v287 = vld [vmem:[#allocation5 + $0x190] sm:$0xff]
        %v288 = vld [vmem:[#allocation5 + $0x198] sm:$0xff]
        %v289 = vld [vmem:[#allocation5 + $0x1a0] sm:$0xf]
        %v290 = vld [vmem:[#allocation5 + $0x1a4] sm:$0xff]
        %v291 = vld [vmem:[#allocation5 + $0x1ac] sm:$0xff]
        %v292 = vld [vmem:[#allocation5 + $0x1b4] sm:$0xff]
        %v293 = vld [vmem:[#allocation5 + $0x1bc] sm:$0xf]
        %v294 = vld [vmem:[#allocation5 + $0x1c0] sm:$0xff]
        %v295 = vld [vmem:[#allocation5 + $0x1c8] sm:$0xff]
        %v296 = vld [vmem:[#allocation5 + $0x1d0] sm:$0xff]
        %v297 = vld [vmem:[#allocation5 + $0x1d8] sm:$0xf]
        %v298 = vld [vmem:[#allocation5 + $0x1dc] sm:$0xff]
        %v299 = vld [vmem:[#allocation5 + $0x1e4] sm:$0xff]
        %v300 = vld [vmem:[#allocation5 + $0x1ec] sm:$0xff]
        %v301 = vld [vmem:[#allocation5 + $0x1f4] sm:$0xf]
        %v302 = vld [vmem:[#allocation7] sm:$0xff]
        %v304 = vperm.slane %v302, 0
        %v305 = vperm.slane %v302, 1
        %v306 = vperm.slane %v302, 2
        %v307 = vperm.slane %v302, 3
        %v308 = vperm.slane %v302, 4
        %v309 = vperm.slane %v302, 5
        %v310 = vperm.slane %v302, 6
        %v322 = vunpack.c.l.b16 %v226
        %v323 = vunpack.c.h.b16 %v226
        %v324 = vunpack.c.l.b16 %v227
        %v325 = vunpack.c.h.b16 %v227
        %v326 = vunpack.c.l.b16 %v228
        %v327 = vunpack.c.h.b16 %v228
        %v328 = vunpack.c.l.b16 %v229
        %v329 = vunpack.c.h.b16 %v229
        %v330 = vpack.c.b16 %v324, %v322
        %v331 = vpack.c.b16 %v325, %v323
        %v332 = vpack.c.b16 %v328, %v326
        %v333 = vpack.c.b16 %v329, %v327
        %v408 = vunpack.c.l.b16 %v230
        %v409 = vunpack.c.h.b16 %v230
        %v410 = vunpack.c.l.b16 %v231
        %v411 = vunpack.c.h.b16 %v231
        %v412 = vunpack.c.l.b16 %v232
        %v413 = vunpack.c.h.b16 %v232
        %v414 = vunpack.c.l.b16 %v233
        %v415 = vunpack.c.l.b16 %v234
        %v416 = vunpack.c.h.b16 %v234
        %v417 = vunpack.c.l.b16 %v235
        %v418 = vunpack.c.h.b16 %v235
        %v419 = vunpack.c.l.b16 %v236
        %v420 = vunpack.c.h.b16 %v236
        %v421 = vunpack.c.l.b16 %v237
        %v422 = vunpack.c.l.b16 %v238
        %v423 = vunpack.c.h.b16 %v238
        %v424 = vunpack.c.l.b16 %v239
        %v425 = vunpack.c.h.b16 %v239
        %v426 = vunpack.c.l.b16 %v240
        %v427 = vunpack.c.h.b16 %v240
        %v428 = vunpack.c.l.b16 %v241
        %v429 = vunpack.c.l.b16 %v242
        %v430 = vunpack.c.h.b16 %v242
        %v431 = vunpack.c.l.b16 %v243
        %v432 = vunpack.c.h.b16 %v243
        %v433 = vunpack.c.l.b16 %v244
        %v434 = vunpack.c.h.b16 %v244
        %v435 = vunpack.c.l.b16 %v245
        %v436 = vunpack.c.l.b16 %v246
        %v437 = vunpack.c.h.b16 %v246
        %v438 = vunpack.c.l.b16 %v247
        %v439 = vunpack.c.h.b16 %v247
        %v440 = vunpack.c.l.b16 %v248
        %v441 = vunpack.c.h.b16 %v248
        %v442 = vunpack.c.l.b16 %v249
        %v443 = vunpack.c.l.b16 %v250
        %v444 = vunpack.c.h.b16 %v250
        %v445 = vunpack.c.l.b16 %v251
        %v446 = vunpack.c.h.b16 %v251
        %v447 = vunpack.c.l.b16 %v252
        %v448 = vunpack.c.h.b16 %v252
        %v449 = vunpack.c.l.b16 %v253
        %v450 = vunpack.c.l.b16 %v254
        %v451 = vunpack.c.h.b16 %v254
        %v452 = vunpack.c.l.b16 %v255
        %v453 = vunpack.c.h.b16 %v255
        %v454 = vunpack.c.l.b16 %v256
        %v455 = vunpack.c.h.b16 %v256
        %v456 = vunpack.c.l.b16 %v257
        %v457 = vunpack.c.l.b16 %v258
        %v458 = vunpack.c.h.b16 %v258
        %v459 = vunpack.c.l.b16 %v259
        %v460 = vunpack.c.h.b16 %v259
        %v461 = vunpack.c.l.b16 %v260
        %v462 = vunpack.c.h.b16 %v260
        %v463 = vunpack.c.l.b16 %v261
        %v464 = vunpack.c.l.b16 %v262
        %v465 = vunpack.c.h.b16 %v262
        %v466 = vunpack.c.l.b16 %v263
        %v467 = vunpack.c.h.b16 %v263
        %v468 = vunpack.c.l.b16 %v264
        %v469 = vunpack.c.h.b16 %v264
        %v470 = vunpack.c.l.b16 %v265
        %v471 = vunpack.c.l.b16 %v266
        %v472 = vunpack.c.h.b16 %v266
        %v473 = vunpack.c.l.b16 %v267
        %v474 = vunpack.c.h.b16 %v267
        %v475 = vunpack.c.l.b16 %v268
        %v476 = vunpack.c.h.b16 %v268
        %v477 = vunpack.c.l.b16 %v269
        %v478 = vunpack.c.l.b16 %v270
        %v479 = vunpack.c.h.b16 %v270
        %v480 = vunpack.c.l.b16 %v271
        %v481 = vunpack.c.h.b16 %v271
        %v482 = vunpack.c.l.b16 %v272
        %v483 = vunpack.c.h.b16 %v272
        %v484 = vunpack.c.l.b16 %v273
        %v485 = vunpack.c.l.b16 %v274
        %v486 = vunpack.c.h.b16 %v274
        %v487 = vunpack.c.l.b16 %v275
        %v488 = vunpack.c.h.b16 %v275
        %v489 = vunpack.c.l.b16 %v276
        %v490 = vunpack.c.h.b16 %v276
        %v491 = vunpack.c.l.b16 %v277
        %v492 = vunpack.c.l.b16 %v278
        %v493 = vunpack.c.h.b16 %v278
        %v494 = vunpack.c.l.b16 %v279
        %v495 = vunpack.c.h.b16 %v279
        %v496 = vunpack.c.l.b16 %v280
        %v497 = vunpack.c.h.b16 %v280
        %v498 = vunpack.c.l.b16 %v281
        %v499 = vunpack.c.l.b16 %v282
        %v500 = vunpack.c.h.b16 %v282
        %v501 = vunpack.c.l.b16 %v283
        %v502 = vunpack.c.h.b16 %v283
        %v503 = vunpack.c.l.b16 %v284
        %v504 = vunpack.c.h.b16 %v284
        %v505 = vunpack.c.l.b16 %v285
        %v506 = vunpack.c.l.b16 %v286
        %v507 = vunpack.c.h.b16 %v286
        %v508 = vunpack.c.l.b16 %v287
        %v509 = vunpack.c.h.b16 %v287
        %v510 = vunpack.c.l.b16 %v288
        %v511 = vunpack.c.h.b16 %v288
        %v512 = vunpack.c.l.b16 %v289
        %v513 = vunpack.c.l.b16 %v290
        %v514 = vunpack.c.h.b16 %v290
        %v515 = vunpack.c.l.b16 %v291
        %v516 = vunpack.c.h.b16 %v291
        %v517 = vunpack.c.l.b16 %v292
        %v518 = vunpack.c.h.b16 %v292
        %v519 = vunpack.c.l.b16 %v293
        %v520 = vunpack.c.l.b16 %v294
        %v521 = vunpack.c.h.b16 %v294
        %v522 = vunpack.c.l.b16 %v295
        %v523 = vunpack.c.h.b16 %v295
        %v524 = vunpack.c.l.b16 %v296
        %v525 = vunpack.c.h.b16 %v296
        %v526 = vunpack.c.l.b16 %v297
        %v527 = vunpack.c.l.b16 %v298
        %v528 = vunpack.c.h.b16 %v298
        %v529 = vunpack.c.l.b16 %v299
        %v530 = vunpack.c.h.b16 %v299
        %v531 = vunpack.c.l.b16 %v300
        %v532 = vunpack.c.h.b16 %v300
        %v533 = vunpack.c.l.b16 %v301
        %v534 = vpack.c.b16 %v415, %v408
        %v535 = vpack.c.b16 %v416, %v409
        %v536 = vpack.c.b16 %v417, %v410
        %v537 = vpack.c.b16 %v418, %v411
        %v538 = vpack.c.b16 %v419, %v412
        %v539 = vpack.c.b16 %v420, %v413
        %v540 = vpack.c.b16 %v421, %v414
        %v541 = vpack.c.b16 %v429, %v422
        %v542 = vpack.c.b16 %v430, %v423
        %v543 = vpack.c.b16 %v431, %v424
        %v544 = vpack.c.b16 %v432, %v425
        %v545 = vpack.c.b16 %v433, %v426
        %v546 = vpack.c.b16 %v434, %v427
        %v547 = vpack.c.b16 %v435, %v428
        %v548 = vpack.c.b16 %v443, %v436
        %v549 = vpack.c.b16 %v444, %v437
        %v550 = vpack.c.b16 %v445, %v438
        %v551 = vpack.c.b16 %v446, %v439
        %v552 = vpack.c.b16 %v447, %v440
        %v553 = vpack.c.b16 %v448, %v441
        %v554 = vpack.c.b16 %v449, %v442
        %v555 = vpack.c.b16 %v457, %v450
        %v556 = vpack.c.b16 %v458, %v451
        %v557 = vpack.c.b16 %v459, %v452
        %v558 = vpack.c.b16 %v460, %v453
        %v559 = vpack.c.b16 %v461, %v454
        %v560 = vpack.c.b16 %v462, %v455
        %v561 = vpack.c.b16 %v463, %v456
        %v562 = vpack.c.b16 %v471, %v464
        %v563 = vpack.c.b16 %v472, %v465
        %v564 = vpack.c.b16 %v473, %v466
        %v565 = vpack.c.b16 %v474, %v467
        %v566 = vpack.c.b16 %v475, %v468
        %v567 = vpack.c.b16 %v476, %v469
        %v568 = vpack.c.b16 %v477, %v470
        %v569 = vpack.c.b16 %v485, %v478
        %v570 = vpack.c.b16 %v486, %v479
        %v571 = vpack.c.b16 %v487, %v480
        %v572 = vpack.c.b16 %v488, %v481
        %v573 = vpack.c.b16 %v489, %v482
        %v574 = vpack.c.b16 %v490, %v483
        %v575 = vpack.c.b16 %v491, %v484
        %v576 = vpack.c.b16 %v499, %v492
        %v577 = vpack.c.b16 %v500, %v493
        %v578 = vpack.c.b16 %v501, %v494
        %v579 = vpack.c.b16 %v502, %v495
        %v580 = vpack.c.b16 %v503, %v496
        %v581 = vpack.c.b16 %v504, %v497
        %v582 = vpack.c.b16 %v505, %v498
        %v583 = vpack.c.b16 %v513, %v506
        %v584 = vpack.c.b16 %v514, %v507
        %v585 = vpack.c.b16 %v515, %v508
        %v586 = vpack.c.b16 %v516, %v509
        %v587 = vpack.c.b16 %v517, %v510
        %v588 = vpack.c.b16 %v518, %v511
        %v589 = vpack.c.b16 %v519, %v512
        %v590 = vpack.c.b16 %v527, %v520
        %v591 = vpack.c.b16 %v528, %v521
        %v592 = vpack.c.b16 %v529, %v522
        %v593 = vpack.c.b16 %v530, %v523
        %v594 = vpack.c.b16 %v531, %v524
        %v595 = vpack.c.b16 %v532, %v525
        %v596 = vpack.c.b16 %v533, %v526
        %vm660 = vcmask 130048
        %v662 = vsel %vm660, %v331, 0
        %v665 = vsel %vm660, %v333, 0
        %667 = vmatpush.bf16.msra.mxu0 %v583
        %668 = vmatpush.bf16.msra.mxu0 %v576
        %669 = vmatpush.bf16.msra.mxu0 %v569
        %670 = vmatpush.bf16.msra.mxu0 %v562
        %671 = vmatpush.bf16.msra.mxu0 %v555
        %672 = vmatpush.bf16.msra.mxu0 %v548
        %673 = vmatpush.bf16.msra.mxu0 %v541
        %674 = vmatpush.bf16.msra.mxu0 %v534
        %675 = vmatmul.bf16.gmra.mxu0 %v330
        %v676 = vpop.f32.mrf.mxu0
        %v677 = vadd.f32 %v304, %v676
        %v678 = vpop.f32.mrf.mxu0
        %v679 = vadd.f32 %v304, %v678
        %680 = vmatmul.bf16.gmra.mxu0 %v332
        %v681 = vpop.f32.mrf.mxu0
        %v682 = vadd.f32 %v304, %v681
        %v683 = vpop.f32.mrf.mxu0
        %v684 = vadd.f32 %v304, %v683
        %685 = vdwg.mxu0
        %686 = vmatpush.bf16.msra.mxu0 0
        %687 = vmatpush.bf16.msra.mxu0 0
        %688 = vmatpush.bf16.msra.mxu0 0
        %689 = vmatpush.bf16.msra.mxu0 0
        %690 = vmatpush.bf16.msra.mxu0 0
        %691 = vmatpush.bf16.msra.mxu0 0
        %692 = vmatpush.bf16.msra.mxu0 0
        %693 = vmatpush.bf16.msra.mxu0 %v590
        %694 = vmatmul.bf16.gmra.mxu0 %v662
        %v695 = vpop.f32.mrf.mxu0
        %v696 = vadd.f32 %v677, %v695
        %v697 = vpop.f32.mrf.mxu0
        %v698 = vadd.f32 %v679, %v697
        %699 = vmatmul.bf16.gmra.mxu0 %v665
        %v700 = vpop.f32.mrf.mxu0
        %v701 = vadd.f32 %v682, %v700
        %v702 = vpop.f32.mrf.mxu0
        %v703 = vadd.f32 %v684, %v702
        %704 = vdwg.mxu0
        %705 = vmatpush.bf16.msra.mxu0 %v584
        %706 = vmatpush.bf16.msra.mxu0 %v577
        %707 = vmatpush.bf16.msra.mxu0 %v570
        %708 = vmatpush.bf16.msra.mxu0 %v563
        %709 = vmatpush.bf16.msra.mxu0 %v556
        %710 = vmatpush.bf16.msra.mxu0 %v549
        %711 = vmatpush.bf16.msra.mxu0 %v542
        %712 = vmatpush.bf16.msra.mxu0 %v535
        %713 = vmatmul.bf16.gmra.mxu0 %v330
        %v714 = vpop.f32.mrf.mxu0
        %v715 = vadd.f32 %v305, %v714
        %v716 = vpop.f32.mrf.mxu0
        %v717 = vadd.f32 %v305, %v716
        %718 = vmatmul.bf16.gmra.mxu0 %v332
        %v719 = vpop.f32.mrf.mxu0
        %v720 = vadd.f32 %v305, %v719
        %v721 = vpop.f32.mrf.mxu0
        %v722 = vadd.f32 %v305, %v721
        %723 = vdwg.mxu0
        %724 = vmatpush.bf16.msra.mxu0 0
        %725 = vmatpush.bf16.msra.mxu0 0
        %726 = vmatpush.bf16.msra.mxu0 0
        %727 = vmatpush.bf16.msra.mxu0 0
        %728 = vmatpush.bf16.msra.mxu0 0
        %729 = vmatpush.bf16.msra.mxu0 0
        %730 = vmatpush.bf16.msra.mxu0 0
        %731 = vmatpush.bf16.msra.mxu0 %v591
        %732 = vmatmul.bf16.gmra.mxu0 %v662
        %v733 = vpop.f32.mrf.mxu0
        %v734 = vadd.f32 %v715, %v733
        %v735 = vpop.f32.mrf.mxu0
        %v736 = vadd.f32 %v717, %v735
        %737 = vmatmul.bf16.gmra.mxu0 %v665
        %v738 = vpop.f32.mrf.mxu0
        %v739 = vadd.f32 %v720, %v738
        %v740 = vpop.f32.mrf.mxu0
        %v741 = vadd.f32 %v722, %v740
        %742 = vdwg.mxu0
        %743 = vmatpush.bf16.msra.mxu0 %v585
        %744 = vmatpush.bf16.msra.mxu0 %v578
        %745 = vmatpush.bf16.msra.mxu0 %v571
        %746 = vmatpush.bf16.msra.mxu0 %v564
        %747 = vmatpush.bf16.msra.mxu0 %v557
        %748 = vmatpush.bf16.msra.mxu0 %v550
        %749 = vmatpush.bf16.msra.mxu0 %v543
        %750 = vmatpush.bf16.msra.mxu0 %v536
        %751 = vmatmul.bf16.gmra.mxu0 %v330
        %v752 = vpop.f32.mrf.mxu0
        %v753 = vadd.f32 %v306, %v752
        %v754 = vpop.f32.mrf.mxu0
        %v755 = vadd.f32 %v306, %v754
        %756 = vmatmul.bf16.gmra.mxu0 %v332
        %v757 = vpop.f32.mrf.mxu0
        %v758 = vadd.f32 %v306, %v757
        %v759 = vpop.f32.mrf.mxu0
        %v760 = vadd.f32 %v306, %v759
        %761 = vdwg.mxu0
        %762 = vmatpush.bf16.msra.mxu0 0
        %763 = vmatpush.bf16.msra.mxu0 0
        %764 = vmatpush.bf16.msra.mxu0 0
        %765 = vmatpush.bf16.msra.mxu0 0
        %766 = vmatpush.bf16.msra.mxu0 0
        %767 = vmatpush.bf16.msra.mxu0 0
        %768 = vmatpush.bf16.msra.mxu0 0
        %769 = vmatpush.bf16.msra.mxu0 %v592
        %770 = vmatmul.bf16.gmra.mxu0 %v662
        %v771 = vpop.f32.mrf.mxu0
        %v772 = vadd.f32 %v753, %v771
        %v773 = vpop.f32.mrf.mxu0
        %v774 = vadd.f32 %v755, %v773
        %775 = vmatmul.bf16.gmra.mxu0 %v665
        %v776 = vpop.f32.mrf.mxu0
        %v777 = vadd.f32 %v758, %v776
        %v778 = vpop.f32.mrf.mxu0
        %v779 = vadd.f32 %v760, %v778
        %780 = vdwg.mxu0
        %781 = vmatpush.bf16.msra.mxu0 %v586
        %782 = vmatpush.bf16.msra.mxu0 %v579
        %783 = vmatpush.bf16.msra.mxu0 %v572
        %784 = vmatpush.bf16.msra.mxu0 %v565
        %785 = vmatpush.bf16.msra.mxu0 %v558
        %786 = vmatpush.bf16.msra.mxu0 %v551
        %787 = vmatpush.bf16.msra.mxu0 %v544
        %788 = vmatpush.bf16.msra.mxu0 %v537
        %789 = vmatmul.bf16.gmra.mxu0 %v330
        %v790 = vpop.f32.mrf.mxu0
        %v791 = vadd.f32 %v307, %v790
        %v792 = vpop.f32.mrf.mxu0
        %v793 = vadd.f32 %v307, %v792
        %794 = vmatmul.bf16.gmra.mxu0 %v332
        %v795 = vpop.f32.mrf.mxu0
        %v796 = vadd.f32 %v307, %v795
        %v797 = vpop.f32.mrf.mxu0
        %v798 = vadd.f32 %v307, %v797
        %799 = vdwg.mxu0
        %800 = vmatpush.bf16.msra.mxu0 0
        %801 = vmatpush.bf16.msra.mxu0 0
        %802 = vmatpush.bf16.msra.mxu0 0
        %803 = vmatpush.bf16.msra.mxu0 0
        %804 = vmatpush.bf16.msra.mxu0 0
        %805 = vmatpush.bf16.msra.mxu0 0
        %806 = vmatpush.bf16.msra.mxu0 0
        %807 = vmatpush.bf16.msra.mxu0 %v593
        %808 = vmatmul.bf16.gmra.mxu0 %v662
        %v809 = vpop.f32.mrf.mxu0
        %v810 = vadd.f32 %v791, %v809
        %v811 = vpop.f32.mrf.mxu0
        %v812 = vadd.f32 %v793, %v811
        %813 = vmatmul.bf16.gmra.mxu0 %v665
        %v814 = vpop.f32.mrf.mxu0
        %v815 = vadd.f32 %v796, %v814
        %v816 = vpop.f32.mrf.mxu0
        %v817 = vadd.f32 %v798, %v816
        %818 = vdwg.mxu0
        %819 = vmatpush.bf16.msra.mxu0 %v587
        %820 = vmatpush.bf16.msra.mxu0 %v580
        %821 = vmatpush.bf16.msra.mxu0 %v573
        %822 = vmatpush.bf16.msra.mxu0 %v566
        %823 = vmatpush.bf16.msra.mxu0 %v559
        %824 = vmatpush.bf16.msra.mxu0 %v552
        %825 = vmatpush.bf16.msra.mxu0 %v545
        %826 = vmatpush.bf16.msra.mxu0 %v538
        %827 = vmatmul.bf16.gmra.mxu0 %v330
        %v828 = vpop.f32.mrf.mxu0
        %v829 = vadd.f32 %v308, %v828
        %v830 = vpop.f32.mrf.mxu0
        %v831 = vadd.f32 %v308, %v830
        %832 = vmatmul.bf16.gmra.mxu0 %v332
        %v833 = vpop.f32.mrf.mxu0
        %v834 = vadd.f32 %v308, %v833
        %v835 = vpop.f32.mrf.mxu0
        %v836 = vadd.f32 %v308, %v835
        %837 = vdwg.mxu0
        %838 = vmatpush.bf16.msra.mxu0 0
        %839 = vmatpush.bf16.msra.mxu0 0
        %840 = vmatpush.bf16.msra.mxu0 0
        %841 = vmatpush.bf16.msra.mxu0 0
        %842 = vmatpush.bf16.msra.mxu0 0
        %843 = vmatpush.bf16.msra.mxu0 0
        %844 = vmatpush.bf16.msra.mxu0 0
        %845 = vmatpush.bf16.msra.mxu0 %v594
        %846 = vmatmul.bf16.gmra.mxu0 %v662
        %v847 = vpop.f32.mrf.mxu0
        %v848 = vadd.f32 %v829, %v847
        %v849 = vpop.f32.mrf.mxu0
        %v850 = vadd.f32 %v831, %v849
        %851 = vmatmul.bf16.gmra.mxu0 %v665
        %v852 = vpop.f32.mrf.mxu0
        %v853 = vadd.f32 %v834, %v852
        %v854 = vpop.f32.mrf.mxu0
        %v855 = vadd.f32 %v836, %v854
        %856 = vdwg.mxu0
        %857 = vmatpush.bf16.msra.mxu0 %v588
        %858 = vmatpush.bf16.msra.mxu0 %v581
        %859 = vmatpush.bf16.msra.mxu0 %v574
        %860 = vmatpush.bf16.msra.mxu0 %v567
        %861 = vmatpush.bf16.msra.mxu0 %v560
        %862 = vmatpush.bf16.msra.mxu0 %v553
        %863 = vmatpush.bf16.msra.mxu0 %v546
        %864 = vmatpush.bf16.msra.mxu0 %v539
        %865 = vmatmul.bf16.gmra.mxu0 %v330
        %v866 = vpop.f32.mrf.mxu0
        %v867 = vadd.f32 %v309, %v866
        %v868 = vpop.f32.mrf.mxu0
        %v869 = vadd.f32 %v309, %v868
        %870 = vmatmul.bf16.gmra.mxu0 %v332
        %v871 = vpop.f32.mrf.mxu0
        %v872 = vadd.f32 %v309, %v871
        %v873 = vpop.f32.mrf.mxu0
        %v874 = vadd.f32 %v309, %v873
        %875 = vdwg.mxu0
        %876 = vmatpush.bf16.msra.mxu0 0
        %877 = vmatpush.bf16.msra.mxu0 0
        %878 = vmatpush.bf16.msra.mxu0 0
        %879 = vmatpush.bf16.msra.mxu0 0
        %880 = vmatpush.bf16.msra.mxu0 0
        %881 = vmatpush.bf16.msra.mxu0 0
        %882 = vmatpush.bf16.msra.mxu0 0
        %883 = vmatpush.bf16.msra.mxu0 %v595
        %884 = vmatmul.bf16.gmra.mxu0 %v662
        %v885 = vpop.f32.mrf.mxu0
        %v886 = vadd.f32 %v867, %v885
        %v887 = vpop.f32.mrf.mxu0
        %v888 = vadd.f32 %v869, %v887
        %889 = vmatmul.bf16.gmra.mxu0 %v665
        %v890 = vpop.f32.mrf.mxu0
        %v891 = vadd.f32 %v872, %v890
        %v892 = vpop.f32.mrf.mxu0
        %v893 = vadd.f32 %v874, %v892
        %894 = vdwg.mxu0
        %895 = vmatpush.bf16.msra.mxu0 %v589
        %896 = vmatpush.bf16.msra.mxu0 %v582
        %897 = vmatpush.bf16.msra.mxu0 %v575
        %898 = vmatpush.bf16.msra.mxu0 %v568
        %899 = vmatpush.bf16.msra.mxu0 %v561
        %900 = vmatpush.bf16.msra.mxu0 %v554
        %901 = vmatpush.bf16.msra.mxu0 %v547
        %902 = vmatpush.bf16.msra.mxu0 %v540
        %903 = vmatmul.bf16.gmra.mxu0 %v330
        %v904 = vpop.f32.mrf.mxu0
        %v905 = vadd.f32 %v310, %v904
        %v906 = vpop.f32.mrf.mxu0
        %v907 = vadd.f32 %v310, %v906
        %908 = vmatmul.bf16.gmra.mxu0 %v332
        %v909 = vpop.f32.mrf.mxu0
        %v910 = vadd.f32 %v310, %v909
        %v911 = vpop.f32.mrf.mxu0
        %v912 = vadd.f32 %v310, %v911
        %913 = vdwg.mxu0
        %914 = vmatpush.bf16.msra.mxu0 0
        %915 = vmatpush.bf16.msra.mxu0 0
        %916 = vmatpush.bf16.msra.mxu0 0
        %917 = vmatpush.bf16.msra.mxu0 0
        %918 = vmatpush.bf16.msra.mxu0 0
        %919 = vmatpush.bf16.msra.mxu0 0
        %920 = vmatpush.bf16.msra.mxu0 0
        %921 = vmatpush.bf16.msra.mxu0 %v596
        %922 = vmatmul.bf16.gmra.mxu0 %v662
        %v923 = vpop.f32.mrf.mxu0
        %v924 = vadd.f32 %v905, %v923
        %v925 = vpop.f32.mrf.mxu0
        %v926 = vadd.f32 %v907, %v925
        %927 = vmatmul.bf16.gmra.mxu0 %v665
        %v928 = vpop.f32.mrf.mxu0
        %v929 = vadd.f32 %v910, %v928
        %v930 = vpop.f32.mrf.mxu0
        %v931 = vadd.f32 %v912, %v930
        %932 = vdwg.mxu0
        %933 = vst [vmem:[%s222] sm:$0xff] %v696
        %934 = vst [vmem:[%s222 + $0x8] sm:$0xff] %v734
        %935 = vst [vmem:[%s222 + $0x10] sm:$0xff] %v772
        %936 = vst [vmem:[%s222 + $0x18] sm:$0xff] %v810
        %937 = vst [vmem:[%s222 + $0x20] sm:$0xff] %v848
        %938 = vst [vmem:[%s222 + $0x28] sm:$0xff] %v886
        %939 = vst [vmem:[%s222 + $0x30] sm:$0xff] %v924
        %940 = vst [vmem:[%s222 + $0x38] sm:$0xff] %v698
        %941 = vst [vmem:[%s222 + $0x40] sm:$0xff] %v736
        %942 = vst [vmem:[%s222 + $0x48] sm:$0xff] %v774
        %943 = vst [vmem:[%s222 + $0x50] sm:$0xff] %v812
        %944 = vst [vmem:[%s222 + $0x58] sm:$0xff] %v850
        %945 = vst [vmem:[%s222 + $0x60] sm:$0xff] %v888
        %946 = vst [vmem:[%s222 + $0x68] sm:$0xff] %v926
        %947 = vst [vmem:[%s222 + $0x70] sm:$0xff] %v701
        %948 = vst [vmem:[%s222 + $0x78] sm:$0xff] %v739
        %949 = vst [vmem:[%s222 + $0x80] sm:$0xff] %v777
        %950 = vst [vmem:[%s222 + $0x88] sm:$0xff] %v815
        %951 = vst [vmem:[%s222 + $0x90] sm:$0xff] %v853
        %952 = vst [vmem:[%s222 + $0x98] sm:$0xff] %v891
        %953 = vst [vmem:[%s222 + $0xa0] sm:$0xff] %v929
        %954 = vst [vmem:[%s222 + $0xa8] sm:$0xff] %v703
        %955 = vst [vmem:[%s222 + $0xb0] sm:$0xff] %v741
        %956 = vst [vmem:[%s222 + $0xb8] sm:$0xff] %v779
        %957 = vst [vmem:[%s222 + $0xc0] sm:$0xff] %v817
        %958 = vst [vmem:[%s222 + $0xc8] sm:$0xff] %v855
        %959 = vst [vmem:[%s222 + $0xd0] sm:$0xff] %v893
        %960 = vst [vmem:[%s222 + $0xd8] sm:$0xff] %v931
        %s961 = sand.u32 %s97, 1
        %s962 = scalar_lea.sflag [#allocation4], %s961
        %s963 = sand.u32 %s97, 1
        %s964 = smul.addr %s963, 224
        %s965 = scalar_lea.vmem [#allocation8], %s964
        // Predicated region
        $region45: #{tpu_custom_call.1} parent=31 // pred_check
          %p966 = pneg %p107
        $region46: #{tpu_custom_call.1} parent=31 // pred_check_branch
          %968 = sbr.rel (%p966) target = $region48
        $region47: #{tpu_custom_call.1} parent=31 // pred_region
          %s969 = smul.u32 4, %s21
          %971 = vsyncadd %s962, 0
          %s972 = smul.addr %s969, 7
          %s973 = smul.addr %s972, 8
          %s974 = scalar_lea.hbm %s3, %s973
          %s975 = sshll.u32 %s965, 4
          %s976 = int_to_ptr.vmem [resolvable:$true] %s975
          %s977 = sshll.u32 %s974, 4
          %s978 = int_to_ptr.hbm [resolvable:$true] %s977
          %983 = dma.vmem_to_hbm [thread:$0]  %s976, 3584, %s978, %s962, 896, 896, 56
        $region48: #{tpu_custom_call.1} parent=31 // pred_fallthru
          _
      $region32: #{tpu_custom_call.1} parent=5 // pred_fallthru
        _
      %p984 = scmp.le.s32.totalorder 2, %s16
      // Predicated region
      $region49: #{tpu_custom_call.1} parent=5 // pred_check
        %p985 = pneg %p984
      $region50: #{tpu_custom_call.1} parent=5 // pred_check_branch
        %987 = sbr.rel (%p985) target = $region52
      $region51: #{tpu_custom_call.1} parent=5 // pred_region
        %s988 = ssub.s32 %s16, 2
        // Predicated region
        $region53: #{tpu_custom_call.1} parent=51 // pred_check
          %p989 = pneg %p113
        $region54: #{tpu_custom_call.1} parent=51 // pred_check_branch
          %991 = sbr.rel (%p989) target = $region56
        $region55: #{tpu_custom_call.1} parent=51 // pred_region
          %s992 = sand.u32 %s98, 1
          %s993 = scalar_lea.sflag [#allocation4], %s992
          %s994 = sand.u32 %s98, 1
          %s995 = smul.addr %s994, 224
          %s996 = scalar_lea.vmem [#allocation8], %s995
          %998 = dma.done %s993, 3584
        $region56: #{tpu_custom_call.1} parent=51 // pred_fallthru
          _
      $region52: #{tpu_custom_call.1} parent=5 // pred_fallthru
        _
    $region6: #{tpu_custom_call.1} parent=1 // loop_footer
      %s20 = sadd.s32 1, %s16
    $region7: #{tpu_custom_call.1} parent=1 // loop_footer_branch
      %15 = sbr.rel target = $region3
    $region8: #{tpu_custom_call.1} parent=1 // loop_exit
      _
    %999 = vsyncpa [#allocation3], 1
    %s1000 = scalar_lea.sflag [#allocation3], 1
    %1001 = vsyncpa %s1000, 1
    %1002 = vsyncpa [#allocation6], 1
    %1003 = vsyncpa [#allocation4], 1
    %s1004 = scalar_lea.sflag [#allocation4], 1
    %1005 = vsyncpa %s1004, 1

</llo_original>
